<compile_context>
chip_gen: v7x
topology: tpu7x:2x2x1
jax: 0.10.0
libtpu: 0.0.40
codegen_flags: <defaults>
</compile_context>

<pallas_src>
import functools

import jax
import jax.numpy as jnp
from jax import lax
from jax.experimental import pallas as pl
from jax.experimental.pallas import tpu as pltpu


# indices into the packed (H,H) weight stack / (1,H) bias stack
W_NE2, W_EE2ME, W_MS, W_MD, W_M2UA, W_UN, W_U2, W_D1 = range(8)
B_NE1, B_NE2, B_EE1, B_EE2ME, B_M1, B_M2UA, B_U1, B_U2, B_D1 = range(9)


# ----------------------------- Pallas kernel ------------------------------ #
def _score_kernel(
    x_ref, ea_ref, src_ref, dst_ref,            # per-step blocks (G graphs each)
    w_hh_ref, b_ref, w_ne1_ref, w_ee1_ref,      # shared parameters
    w_d2_ref, b_d2_ref,
    out_ref,
):
    f32, bf16 = jnp.float32, jnp.bfloat16
    GN = x_ref.shape[0]     # graphs_per_step * N
    GE = ea_ref.shape[0]    # graphs_per_step * E

    def dot(a, b):          # bf16 MXU operands, f32 accumulation
        return jnp.dot(a.astype(bf16), b.astype(bf16), preferred_element_type=f32)

    def relu(v):
        return jnp.maximum(v, 0.0)

    def w(i):               # (H, H) bf16 weight, static slice of the packed stack
        return w_hh_ref[i]

    def b(i):               # (1, H) f32 bias, static slice of the packed stack
        return b_ref[pl.ds(i, 1), :]

    x = x_ref[...]          # (GN, DX) bf16
    ea = ea_ref[...]        # (GE, DE) bf16
    src = src_ref[...]      # (GE, 1) int32, pre-offset by local_graph * N
    dst = dst_ref[...]      # (GE, 1) int32, pre-offset by local_graph * N

    # ----- encoder (t-emb folded into b_ne1; w_me folded into the edge branch) -----
    h_node = dot(relu(dot(x, w_ne1_ref[...]) + b(B_NE1)), w(W_NE2)) + b(B_NE2)       # (GN,H)
    e_msg = dot(relu(dot(ea, w_ee1_ref[...]) + b(B_EE1)), w(W_EE2ME)) + b(B_EE2ME)   # (GE,H)

    # ----- processor: one message-passing layer (all graphs of this step) -----
    hb = h_node.astype(bf16)                                # single cast, reused
    p_src = jnp.dot(hb, w(W_MS), preferred_element_type=f32)   # (GN,H)
    p_dst = jnp.dot(hb, w(W_MD), preferred_element_type=f32)   # (GN,H)

    # combined src/dst gather: one (GE, 2*GN) block-diagonal one-hot built
    # in-kernel, sublane-concat of the projections -> a single MXU contraction
    iota2 = lax.broadcasted_iota(jnp.int32, (GE, 2 * GN), 1)
    g_cond = jnp.logical_or(iota2 == src, iota2 == dst + GN)
    gath_oh = jnp.where(g_cond, 1.0, 0.0).astype(bf16)          # exact 0/1
    p_sd = jnp.concatenate([p_src, p_dst], axis=0)               # (2*GN, H)

    m_pre = relu(dot(gath_oh, p_sd) + e_msg + b(B_M1))           # (GE,H)
    msg_u = dot(m_pre, w(W_M2UA)) + b(B_M2UA)                    # (GE,H) == msg @ w_ua

    # scatter-add into destination nodes: contract the edge axis directly
    iota1 = lax.broadcasted_iota(jnp.int32, (GE, GN), 1)
    dst_oh = jnp.where(iota1 == dst, 1.0, 0.0).astype(bf16)      # (GE, GN)
    agg_u = lax.dot_general(dst_oh, msg_u.astype(bf16),
                            dimension_numbers=(((0,), (0,)), ((), ())),
                            preferred_element_type=f32)          # (GN,H) == agg @ w_ua

    u_pre = relu(dot(hb, w(W_UN)) + agg_u + b(B_U1))
    h_node = h_node + dot(u_pre, w(W_U2)) + b(B_U2)              # residual node update
    # h_edge update (h_edge + msg) is not needed by the decoder output.

    # ----- decoder (1/sigma folded; head zero-padded to 128 lanes) -----
    d_pre = relu(dot(h_node, w(W_D1)) + b(B_D1))
    out_ref[...] = (dot(d_pre, w_d2_ref[...]) + b_d2_ref[...]).astype(out_ref.dtype)


# ------------------------------- wrapper ----------------------------------- #
def init_params(key, dx, de, dt, hidden, dout):
    """Deterministic synthetic parameters (matching the MLP shapes)."""
    def w(k, shape):
        return (0.1 * jax.random.normal(k, shape)).astype(jnp.float32)

    names_shapes = [
        ("w_ne1", (dx + dt, hidden)), ("b_ne1", (1, hidden)),
        ("w_ne2", (hidden, hidden)),  ("b_ne2", (1, hidden)),
        ("w_ee1", (de, hidden)),      ("b_ee1", (1, hidden)),
        ("w_ee2", (hidden, hidden)),  ("b_ee2", (1, hidden)),
        ("w_ms", (hidden, hidden)), ("w_md", (hidden, hidden)),
        ("w_me", (hidden, hidden)), ("b_m1", (1, hidden)),
        ("w_m2", (hidden, hidden)), ("b_m2", (1, hidden)),
        ("w_un", (hidden, hidden)), ("w_ua", (hidden, hidden)),
        ("b_u1", (1, hidden)),
        ("w_u2", (hidden, hidden)), ("b_u2", (1, hidden)),
        ("w_d1", (hidden, hidden)), ("b_d1", (1, hidden)),
        ("w_d2", (hidden, dout)),   ("b_d2", (1, dout)),
    ]
    keys = jax.random.split(key, len(names_shapes))
    return {name: w(k, shape) for k, (name, shape) in zip(keys, names_shapes)}


@functools.partial(jax.jit, static_argnames=("dt", "graphs_per_step"))
def score_model(x, edge_index, edge_attr, t, sigma, params, dt=4, graphs_per_step=None):
    """Batched ScoreModel.forward: each batch element is exactly the original
    single-graph forward (shared scalar t / sigma across the batch)."""
    f32, bf16 = jnp.float32, jnp.bfloat16
    B, N, dx = x.shape
    E = edge_attr.shape[1]
    de = edge_attr.shape[2]
    H = params["w_ne2"].shape[0]
    dout = params["w_d2"].shape[1]
    DP = 128                                  # lane-dense padded output width

    # graphs per grid step: keep >= 2 grid steps when possible (v7x megacore)
    G = graphs_per_step
    if G is None:
        G = B // 2 if (B % 2 == 0 and B >= 2) else 1
    assert B % G == 0
    steps = B // G
    GN, GE = G * N, G * E

    # --- sinusoidal time embedding, folded into the first encoder bias ---
    half = dt // 2
    freqs = jnp.exp(jnp.arange(half, dtype=f32)
                    * (-jnp.log(10000.0) / max(half - 1, 1)))
    ang = jnp.reshape(t, ()).astype(f32) * freqs
    t_emb = jnp.concatenate([jnp.sin(ang), jnp.cos(ang)], axis=-1)[None, :]   # [1,dt]
    b_ne1_eff = params["b_ne1"] + t_emb @ params["w_ne1"][dx:, :]             # [1,H]
    w_ne1_x = params["w_ne1"][:dx, :]                                         # [dx,H]

    # --- fold w_me into the edge encoder and w_ua into the message MLP ---
    # (exact: h_edge only feeds the message via w_me; agg only feeds the
    #  node-update via w_ua; the h_edge output itself is discarded)
    w_ee2me = params["w_ee2"] @ params["w_me"]
    b_ee2me = params["b_ee2"] @ params["w_me"]
    w_m2ua = params["w_m2"] @ params["w_ua"]
    b_m2ua = params["b_m2"] @ params["w_ua"]

    # --- fold 1/sigma into the decoder head and pad it to 128 lanes ---
    inv_sigma = 1.0 / jnp.reshape(sigma, ()).astype(f32)
    w_d2_pad = jnp.zeros((H, DP), f32).at[:, :dout].set(params["w_d2"] * inv_sigma)
    b_d2_pad = jnp.zeros((1, DP), f32).at[:, :dout].set(params["b_d2"] * inv_sigma)

    # --- pack parameters: [8,H,H] bf16 weight stack + [9,H] f32 bias stack ---
    w_hh = jnp.stack([params["w_ne2"], w_ee2me, params["w_ms"], params["w_md"],
                      w_m2ua, params["w_un"], params["w_u2"],
                      params["w_d1"]]).astype(bf16)                           # (8,H,H)
    b_stack = jnp.concatenate(
        [b_ne1_eff, params["b_ne2"], params["b_ee1"], b_ee2me, params["b_m1"],
         b_m2ua, params["b_u1"], params["b_u2"], params["b_d1"]],
        axis=0).astype(f32)                                                   # (9,H)

    # --- flatten graphs into rows; offset edge indices by the local graph slot ---
    x2 = x.reshape(B * N, dx).astype(bf16)
    ea2 = edge_attr.reshape(B * E, de).astype(bf16)
    local = ((jnp.arange(B, dtype=jnp.int32) % G) * N)[:, None]               # (B,1)
    src2 = (edge_index[:, 0, :].astype(jnp.int32) + local).reshape(B * E, 1)
    dst2 = (edge_index[:, 1, :].astype(jnp.int32) + local).reshape(B * E, 1)

    def step_rows(rows, cols):
        return pl.BlockSpec((rows, cols), lambda i: (i, 0))

    def shared(shape):
        return pl.BlockSpec(shape, lambda i: (0,) * len(shape))

    out2 = pl.pallas_call(
        _score_kernel,
        out_shape=jax.ShapeDtypeStruct((B * N, DP), f32),
        grid=(steps,),
        in_specs=[
            step_rows(GN, dx),     # x (flattened over the G graphs of the step)
            step_rows(GE, de),     # edge_attr
            step_rows(GE, 1),      # src indices (int32, local-offset)
            step_rows(GE, 1),      # dst indices (int32, local-offset)
            shared((8, H, H)),     # packed (H,H) weights
            shared((9, H)),        # packed (1,H) biases
            shared((dx, H)),       # w_ne1 (node-feature part)
            shared((de, H)),       # w_ee1
            shared((H, DP)),       # decoder head (1/sigma folded, lane-padded)
            shared((1, DP)),       # decoder bias (1/sigma folded, lane-padded)
        ],
        out_specs=step_rows(GN, DP),
        compiler_params=pltpu.CompilerParams(
            dimension_semantics=("parallel",),
            vmem_limit_bytes=32 * 1024 * 1024),
    )(x2, ea2, src2, dst2, w_hh, b_stack,
      w_ne1_x.astype(bf16), params["w_ee1"].astype(bf16), w_d2_pad.astype(bf16),
      b_d2_pad)

    return out2[:, :dout].reshape(B, N, dout)


# --------------------------------- main ------------------------------------ #
if __name__ == "__main__":
    key = jax.random.PRNGKey(0)
    k_x, k_e, k_ei, k_p = jax.random.split(key, 4)

    B, N, E = 4, 16, 32        # graphs, nodes, edges
    DX, DE, DT = 8, 4, 4       # node feat, edge feat, time-embed dims
    HIDDEN, DOUT = 32, 3

    x = jax.random.normal(k_x, (B, N, DX), dtype=jnp.float32)
    edge_attr = jax.random.normal(k_e, (B, E, DE), dtype=jnp.float32)
    edge_index = jax.random.randint(k_ei, (B, 2, E), 0, N, dtype=jnp.int32)
    t = jnp.float32(0.5)
    sigma = jnp.float32(2.0)

    params = init_params(k_p, DX, DE, DT, HIDDEN, DOUT)

    out = score_model(x, edge_index, edge_attr, t, sigma, params, dt=DT)
    out = jax.block_until_ready(out)
    assert out.shape == (B, N, DOUT) and bool(jnp.all(jnp.isfinite(out)))
    print("KERNEL_OK")
</pallas_src>

<mosaic_0001>
module attributes {stable_mosaic.version = 11 : i64} {
  func.func @_score_kernel(%arg0: i32, %arg1: memref<32x8xbf16, #tpu.memory_space<vmem>>, %arg2: memref<64x4xbf16, #tpu.memory_space<vmem>>, %arg3: memref<64x1xi32, #tpu.memory_space<vmem>>, %arg4: memref<64x1xi32, #tpu.memory_space<vmem>>, %arg5: memref<8x32x32xbf16, #tpu.memory_space<vmem>>, %arg6: memref<9x32xf32, #tpu.memory_space<vmem>>, %arg7: memref<8x32xbf16, #tpu.memory_space<vmem>>, %arg8: memref<4x32xbf16, #tpu.memory_space<vmem>>, %arg9: memref<32x128xbf16, #tpu.memory_space<vmem>>, %arg10: memref<1x128xf32, #tpu.memory_space<vmem>>, %arg11: memref<32x128xf32, #tpu.memory_space<vmem>>) attributes {dimension_semantics = [#tpu.dimension_semantics<parallel>], iteration_bounds = array<i64: 2>, scalar_prefetch = 0 : i64, scratch_operands = 0 : i64, tpu.core_type = #tpu.core_type<tc>, window_params = [{transform_indices = @transform_0, window_bounds = array<i64: 32, 8>}, {transform_indices = @transform_1, window_bounds = array<i64: 64, 4>}, {transform_indices = @transform_2, window_bounds = array<i64: 64, 1>}, {transform_indices = @transform_3, window_bounds = array<i64: 64, 1>}, {pipeline_mode = #tpu.pipeline_mode<synchronous>, transform_indices = @transform_4, window_bounds = array<i64: 8, 32, 32>}, {pipeline_mode = #tpu.pipeline_mode<synchronous>, transform_indices = @transform_5, window_bounds = array<i64: 9, 32>}, {pipeline_mode = #tpu.pipeline_mode<synchronous>, transform_indices = @transform_6, window_bounds = array<i64: 8, 32>}, {pipeline_mode = #tpu.pipeline_mode<synchronous>, transform_indices = @transform_7, window_bounds = array<i64: 4, 32>}, {pipeline_mode = #tpu.pipeline_mode<synchronous>, transform_indices = @transform_8, window_bounds = array<i64: 32, 128>}, {pipeline_mode = #tpu.pipeline_mode<synchronous>, transform_indices = @transform_9, window_bounds = array<i64: 1, 128>}, {transform_indices = @transform_10, window_bounds = array<i64: 32, 128>}]} {
    %c0 = arith.constant 0 : index
    %c0_0 = arith.constant 0 : index
    %0 = vector.load %arg1[%c0, %c0_0] : memref<32x8xbf16, #tpu.memory_space<vmem>>, vector<32x8xbf16>
    %c0_1 = arith.constant 0 : index
    %c0_2 = arith.constant 0 : index
    %1 = vector.load %arg2[%c0_1, %c0_2] : memref<64x4xbf16, #tpu.memory_space<vmem>>, vector<64x4xbf16>
    %c0_3 = arith.constant 0 : index
    %c0_4 = arith.constant 0 : index
    %2 = vector.load %arg3[%c0_3, %c0_4] : memref<64x1xi32, #tpu.memory_space<vmem>>, vector<64x1xi32>
    %c0_5 = arith.constant 0 : index
    %c0_6 = arith.constant 0 : index
    %3 = vector.load %arg4[%c0_5, %c0_6] : memref<64x1xi32, #tpu.memory_space<vmem>>, vector<64x1xi32>
    %c0_7 = arith.constant 0 : index
    %c0_8 = arith.constant 0 : index
    %4 = vector.load %arg7[%c0_7, %c0_8] : memref<8x32xbf16, #tpu.memory_space<vmem>>, vector<8x32xbf16>
    %cst = arith.constant dense<0.000000e+00> : vector<32x32xf32>
    %5 = tpu.matmul %0, %4, %cst {dimension_numbers = #tpu.dot_dimension_numbers<[1], [0], [0], [1], [0, 0, 1, 1], [], []>} : vector<32x8xbf16>, vector<8x32xbf16>, vector<32x32xf32> -> vector<32x32xf32>
    %c0_9 = arith.constant 0 : index
    %c0_10 = arith.constant 0 : index
    %6 = vector.load %arg6[%c0_9, %c0_10] : memref<9x32xf32, #tpu.memory_space<vmem>>, vector<1x32xf32>
    %7 = vector.broadcast %6 : vector<1x32xf32> to vector<32x32xf32>
    %8 = arith.addf %5, %7 : vector<32x32xf32>
    %cst_11 = arith.constant 0.000000e+00 : f32
    %9 = vector.broadcast %cst_11 : f32 to vector<32x32xf32>
    %10 = arith.maximumf %8, %9 : vector<32x32xf32>
    %c0_12 = arith.constant 0 : index
    %c0_13 = arith.constant 0 : index
    %c0_14 = arith.constant 0 : index
    %11 = vector.load %arg5[%c0_12, %c0_13, %c0_14] : memref<8x32x32xbf16, #tpu.memory_space<vmem>>, vector<1x32x32xbf16>
    %12 = vector.shape_cast %11 : vector<1x32x32xbf16> to vector<32x32xbf16>
    %13 = arith.truncf %10 : vector<32x32xf32> to vector<32x32xbf16>
    %cst_15 = arith.constant dense<0.000000e+00> : vector<32x32xf32>
    %14 = tpu.matmul %13, %12, %cst_15 {dimension_numbers = #tpu.dot_dimension_numbers<[1], [0], [0], [1], [0, 0, 1, 1], [], []>} : vector<32x32xbf16>, vector<32x32xbf16>, vector<32x32xf32> -> vector<32x32xf32>
    %c1 = arith.constant 1 : index
    %c0_16 = arith.constant 0 : index
    %15 = vector.load %arg6[%c1, %c0_16] : memref<9x32xf32, #tpu.memory_space<vmem>>, vector<1x32xf32>
    %16 = vector.broadcast %15 : vector<1x32xf32> to vector<32x32xf32>
    %17 = arith.addf %14, %16 : vector<32x32xf32>
    %c0_17 = arith.constant 0 : index
    %c0_18 = arith.constant 0 : index
    %18 = vector.load %arg8[%c0_17, %c0_18] : memref<4x32xbf16, #tpu.memory_space<vmem>>, vector<4x32xbf16>
    %cst_19 = arith.constant dense<0.000000e+00> : vector<64x32xf32>
    %19 = tpu.matmul %1, %18, %cst_19 {dimension_numbers = #tpu.dot_dimension_numbers<[1], [0], [0], [1], [0, 0, 1, 1], [], []>} : vector<64x4xbf16>, vector<4x32xbf16>, vector<64x32xf32> -> vector<64x32xf32>
    %c2 = arith.constant 2 : index
    %c0_20 = arith.constant 0 : index
    %20 = vector.load %arg6[%c2, %c0_20] : memref<9x32xf32, #tpu.memory_space<vmem>>, vector<1x32xf32>
    %21 = vector.broadcast %20 : vector<1x32xf32> to vector<64x32xf32>
    %22 = arith.addf %19, %21 : vector<64x32xf32>
    %cst_21 = arith.constant 0.000000e+00 : f32
    %23 = vector.broadcast %cst_21 : f32 to vector<64x32xf32>
    %24 = arith.maximumf %22, %23 : vector<64x32xf32>
    %c1_22 = arith.constant 1 : index
    %c0_23 = arith.constant 0 : index
    %c0_24 = arith.constant 0 : index
    %25 = vector.load %arg5[%c1_22, %c0_23, %c0_24] : memref<8x32x32xbf16, #tpu.memory_space<vmem>>, vector<1x32x32xbf16>
    %26 = vector.shape_cast %25 : vector<1x32x32xbf16> to vector<32x32xbf16>
    %27 = arith.truncf %24 : vector<64x32xf32> to vector<64x32xbf16>
    %cst_25 = arith.constant dense<0.000000e+00> : vector<64x32xf32>
    %28 = tpu.matmul %27, %26, %cst_25 {dimension_numbers = #tpu.dot_dimension_numbers<[1], [0], [0], [1], [0, 0, 1, 1], [], []>} : vector<64x32xbf16>, vector<32x32xbf16>, vector<64x32xf32> -> vector<64x32xf32>
    %c3 = arith.constant 3 : index
    %c0_26 = arith.constant 0 : index
    %29 = vector.load %arg6[%c3, %c0_26] : memref<9x32xf32, #tpu.memory_space<vmem>>, vector<1x32xf32>
    %30 = vector.broadcast %29 : vector<1x32xf32> to vector<64x32xf32>
    %31 = arith.addf %28, %30 : vector<64x32xf32>
    %32 = arith.truncf %17 : vector<32x32xf32> to vector<32x32xbf16>
    %c2_27 = arith.constant 2 : index
    %c0_28 = arith.constant 0 : index
    %c0_29 = arith.constant 0 : index
    %33 = vector.load %arg5[%c2_27, %c0_28, %c0_29] : memref<8x32x32xbf16, #tpu.memory_space<vmem>>, vector<1x32x32xbf16>
    %34 = vector.shape_cast %33 : vector<1x32x32xbf16> to vector<32x32xbf16>
    %cst_30 = arith.constant dense<0.000000e+00> : vector<32x32xf32>
    %35 = tpu.matmul %32, %34, %cst_30 {dimension_numbers = #tpu.dot_dimension_numbers<[1], [0], [0], [1], [0, 0, 1, 1], [], []>} : vector<32x32xbf16>, vector<32x32xbf16>, vector<32x32xf32> -> vector<32x32xf32>
    %c3_31 = arith.constant 3 : index
    %c0_32 = arith.constant 0 : index
    %c0_33 = arith.constant 0 : index
    %36 = vector.load %arg5[%c3_31, %c0_32, %c0_33] : memref<8x32x32xbf16, #tpu.memory_space<vmem>>, vector<1x32x32xbf16>
    %37 = vector.shape_cast %36 : vector<1x32x32xbf16> to vector<32x32xbf16>
    %cst_34 = arith.constant dense<0.000000e+00> : vector<32x32xf32>
    %38 = tpu.matmul %32, %37, %cst_34 {dimension_numbers = #tpu.dot_dimension_numbers<[1], [0], [0], [1], [0, 0, 1, 1], [], []>} : vector<32x32xbf16>, vector<32x32xbf16>, vector<32x32xf32> -> vector<32x32xf32>
    %39 = tpu.iota {dimensions = array<i32: 1>} : vector<64x64xi32>
    %40 = vector.broadcast %2 : vector<64x1xi32> to vector<64x64xi32>
    %41 = arith.cmpi eq, %39, %40 : vector<64x64xi32>
    %c32_i32 = arith.constant 32 : i32
    %42 = vector.broadcast %c32_i32 : i32 to vector<64x1xi32>
    %43 = arith.addi %3, %42 : vector<64x1xi32>
    %44 = vector.broadcast %43 : vector<64x1xi32> to vector<64x64xi32>
    %45 = arith.cmpi eq, %39, %44 : vector<64x64xi32>
    %46 = arith.ori %41, %45 : vector<64x64xi1>
    %cst_35 = arith.constant 1.000000e+00 : f32
    %cst_36 = arith.constant 0.000000e+00 : f32
    %47 = vector.broadcast %cst_35 : f32 to vector<64x64xf32>
    %48 = vector.broadcast %cst_36 : f32 to vector<64x64xf32>
    %49 = arith.select %46, %47, %48 : vector<64x64xi1>, vector<64x64xf32>
    %50 = arith.truncf %49 : vector<64x64xf32> to vector<64x64xbf16>
    %51 = tpu.concatenate %35, %38 in 0 : vector<32x32xf32>, vector<32x32xf32> -> vector<64x32xf32>
    %52 = arith.truncf %51 : vector<64x32xf32> to vector<64x32xbf16>
    %cst_37 = arith.constant dense<0.000000e+00> : vector<64x32xf32>
    %53 = tpu.matmul %50, %52, %cst_37 {dimension_numbers = #tpu.dot_dimension_numbers<[1], [0], [0], [1], [0, 0, 1, 1], [], []>} : vector<64x64xbf16>, vector<64x32xbf16>, vector<64x32xf32> -> vector<64x32xf32>
    %54 = arith.addf %53, %31 : vector<64x32xf32>
    %c4 = arith.constant 4 : index
    %c0_38 = arith.constant 0 : index
    %55 = vector.load %arg6[%c4, %c0_38] : memref<9x32xf32, #tpu.memory_space<vmem>>, vector<1x32xf32>
    %56 = vector.broadcast %55 : vector<1x32xf32> to vector<64x32xf32>
    %57 = arith.addf %54, %56 : vector<64x32xf32>
    %cst_39 = arith.constant 0.000000e+00 : f32
    %58 = vector.broadcast %cst_39 : f32 to vector<64x32xf32>
    %59 = arith.maximumf %57, %58 : vector<64x32xf32>
    %c4_40 = arith.constant 4 : index
    %c0_41 = arith.constant 0 : index
    %c0_42 = arith.constant 0 : index
    %60 = vector.load %arg5[%c4_40, %c0_41, %c0_42] : memref<8x32x32xbf16, #tpu.memory_space<vmem>>, vector<1x32x32xbf16>
    %61 = vector.shape_cast %60 : vector<1x32x32xbf16> to vector<32x32xbf16>
    %62 = arith.truncf %59 : vector<64x32xf32> to vector<64x32xbf16>
    %cst_43 = arith.constant dense<0.000000e+00> : vector<64x32xf32>
    %63 = tpu.matmul %62, %61, %cst_43 {dimension_numbers = #tpu.dot_dimension_numbers<[1], [0], [0], [1], [0, 0, 1, 1], [], []>} : vector<64x32xbf16>, vector<32x32xbf16>, vector<64x32xf32> -> vector<64x32xf32>
    %c5 = arith.constant 5 : index
    %c0_44 = arith.constant 0 : index
    %64 = vector.load %arg6[%c5, %c0_44] : memref<9x32xf32, #tpu.memory_space<vmem>>, vector<1x32xf32>
    %65 = vector.broadcast %64 : vector<1x32xf32> to vector<64x32xf32>
    %66 = arith.addf %63, %65 : vector<64x32xf32>
    %67 = tpu.iota {dimensions = array<i32: 1>} : vector<64x32xi32>
    %68 = vector.broadcast %3 : vector<64x1xi32> to vector<64x32xi32>
    %69 = arith.cmpi eq, %67, %68 : vector<64x32xi32>
    %cst_45 = arith.constant 1.000000e+00 : f32
    %cst_46 = arith.constant 0.000000e+00 : f32
    %70 = vector.broadcast %cst_45 : f32 to vector<64x32xf32>
    %71 = vector.broadcast %cst_46 : f32 to vector<64x32xf32>
    %72 = arith.select %69, %70, %71 : vector<64x32xi1>, vector<64x32xf32>
    %73 = arith.truncf %72 : vector<64x32xf32> to vector<64x32xbf16>
    %74 = arith.truncf %66 : vector<64x32xf32> to vector<64x32xbf16>
    %cst_47 = arith.constant dense<0.000000e+00> : vector<32x32xf32>
    %75 = tpu.matmul %73, %74, %cst_47 {dimension_numbers = #tpu.dot_dimension_numbers<[0], [0], [1], [1], [0, 1, 1, 1], [], []>} : vector<64x32xbf16>, vector<64x32xbf16>, vector<32x32xf32> -> vector<32x32xf32>
    %c5_48 = arith.constant 5 : index
    %c0_49 = arith.constant 0 : index
    %c0_50 = arith.constant 0 : index
    %76 = vector.load %arg5[%c5_48, %c0_49, %c0_50] : memref<8x32x32xbf16, #tpu.memory_space<vmem>>, vector<1x32x32xbf16>
    %77 = vector.shape_cast %76 : vector<1x32x32xbf16> to vector<32x32xbf16>
    %cst_51 = arith.constant dense<0.000000e+00> : vector<32x32xf32>
    %78 = tpu.matmul %32, %77, %cst_51 {dimension_numbers = #tpu.dot_dimension_numbers<[1], [0], [0], [1], [0, 0, 1, 1], [], []>} : vector<32x32xbf16>, vector<32x32xbf16>, vector<32x32xf32> -> vector<32x32xf32>
    %79 = arith.addf %78, %75 : vector<32x32xf32>
    %c6 = arith.constant 6 : index
    %c0_52 = arith.constant 0 : index
    %80 = vector.load %arg6[%c6, %c0_52] : memref<9x32xf32, #tpu.memory_space<vmem>>, vector<1x32xf32>
    %81 = vector.broadcast %80 : vector<1x32xf32> to vector<32x32xf32>
    %82 = arith.addf %79, %81 : vector<32x32xf32>
    %cst_53 = arith.constant 0.000000e+00 : f32
    %83 = vector.broadcast %cst_53 : f32 to vector<32x32xf32>
    %84 = arith.maximumf %82, %83 : vector<32x32xf32>
    %c6_54 = arith.constant 6 : index
    %c0_55 = arith.constant 0 : index
    %c0_56 = arith.constant 0 : index
    %85 = vector.load %arg5[%c6_54, %c0_55, %c0_56] : memref<8x32x32xbf16, #tpu.memory_space<vmem>>, vector<1x32x32xbf16>
    %86 = vector.shape_cast %85 : vector<1x32x32xbf16> to vector<32x32xbf16>
    %87 = arith.truncf %84 : vector<32x32xf32> to vector<32x32xbf16>
    %cst_57 = arith.constant dense<0.000000e+00> : vector<32x32xf32>
    %88 = tpu.matmul %87, %86, %cst_57 {dimension_numbers = #tpu.dot_dimension_numbers<[1], [0], [0], [1], [0, 0, 1, 1], [], []>} : vector<32x32xbf16>, vector<32x32xbf16>, vector<32x32xf32> -> vector<32x32xf32>
    %89 = arith.addf %17, %88 : vector<32x32xf32>
    %c7 = arith.constant 7 : index
    %c0_58 = arith.constant 0 : index
    %90 = vector.load %arg6[%c7, %c0_58] : memref<9x32xf32, #tpu.memory_space<vmem>>, vector<1x32xf32>
    %91 = vector.broadcast %90 : vector<1x32xf32> to vector<32x32xf32>
    %92 = arith.addf %89, %91 : vector<32x32xf32>
    %c7_59 = arith.constant 7 : index
    %c0_60 = arith.constant 0 : index
    %c0_61 = arith.constant 0 : index
    %93 = vector.load %arg5[%c7_59, %c0_60, %c0_61] : memref<8x32x32xbf16, #tpu.memory_space<vmem>>, vector<1x32x32xbf16>
    %94 = vector.shape_cast %93 : vector<1x32x32xbf16> to vector<32x32xbf16>
    %95 = arith.truncf %92 : vector<32x32xf32> to vector<32x32xbf16>
    %cst_62 = arith.constant dense<0.000000e+00> : vector<32x32xf32>
    %96 = tpu.matmul %95, %94, %cst_62 {dimension_numbers = #tpu.dot_dimension_numbers<[1], [0], [0], [1], [0, 0, 1, 1], [], []>} : vector<32x32xbf16>, vector<32x32xbf16>, vector<32x32xf32> -> vector<32x32xf32>
    %c8 = arith.constant 8 : index
    %c0_63 = arith.constant 0 : index
    %97 = vector.load %arg6[%c8, %c0_63] : memref<9x32xf32, #tpu.memory_space<vmem>>, vector<1x32xf32>
    %98 = vector.broadcast %97 : vector<1x32xf32> to vector<32x32xf32>
    %99 = arith.addf %96, %98 : vector<32x32xf32>
    %cst_64 = arith.constant 0.000000e+00 : f32
    %100 = vector.broadcast %cst_64 : f32 to vector<32x32xf32>
    %101 = arith.maximumf %99, %100 : vector<32x32xf32>
    %c0_65 = arith.constant 0 : index
    %c0_66 = arith.constant 0 : index
    %102 = vector.load %arg9[%c0_65, %c0_66] : memref<32x128xbf16, #tpu.memory_space<vmem>>, vector<32x128xbf16>
    %103 = arith.truncf %101 : vector<32x32xf32> to vector<32x32xbf16>
    %cst_67 = arith.constant dense<0.000000e+00> : vector<32x128xf32>
    %104 = tpu.matmul %103, %102, %cst_67 {dimension_numbers = #tpu.dot_dimension_numbers<[1], [0], [0], [1], [0, 0, 1, 1], [], []>} : vector<32x32xbf16>, vector<32x128xbf16>, vector<32x128xf32> -> vector<32x128xf32>
    %c0_68 = arith.constant 0 : index
    %c0_69 = arith.constant 0 : index
    %105 = vector.load %arg10[%c0_68, %c0_69] : memref<1x128xf32, #tpu.memory_space<vmem>>, vector<1x128xf32>
    %106 = vector.broadcast %105 : vector<1x128xf32> to vector<32x128xf32>
    %107 = arith.addf %104, %106 : vector<32x128xf32>
    %c0_70 = arith.constant 0 : index
    %c0_71 = arith.constant 0 : index
    %108 = vector.load %arg11[%c0_70, %c0_71] : memref<32x128xf32, #tpu.memory_space<vmem>>, vector<32x128xf32>
    tpu.vector_store %arg11[%c0_70, %c0_71], %107 {strides = array<i32>} : memref<32x128xf32, #tpu.memory_space<vmem>>, vector<32x128xf32>,
    return
  }
  func.func @transform_0(%arg0: i32) -> (i32, i32) {
    %c0_i32 = arith.constant 0 : i32
    %c0_i32_0 = arith.constant 0 : i32
    return %arg0, %c0_i32 : i32, i32
  }
  func.func @transform_1(%arg0: i32) -> (i32, i32) {
    %c0_i32 = arith.constant 0 : i32
    %c0_i32_0 = arith.constant 0 : i32
    return %arg0, %c0_i32 : i32, i32
  }
  func.func @transform_2(%arg0: i32) -> (i32, i32) {
    %c0_i32 = arith.constant 0 : i32
    %c0_i32_0 = arith.constant 0 : i32
    return %arg0, %c0_i32 : i32, i32
  }
  func.func @transform_3(%arg0: i32) -> (i32, i32) {
    %c0_i32 = arith.constant 0 : i32
    %c0_i32_0 = arith.constant 0 : i32
    return %arg0, %c0_i32 : i32, i32
  }
  func.func @transform_4(%arg0: i32) -> (i32, i32, i32) {
    %c0_i32 = arith.constant 0 : i32
    %c0_i32_0 = arith.constant 0 : i32
    %c0_i32_1 = arith.constant 0 : i32
    %c0_i32_2 = arith.constant 0 : i32
    return %c0_i32, %c0_i32_0, %c0_i32_1 : i32, i32, i32
  }
  func.func @transform_5(%arg0: i32) -> (i32, i32) {
    %c0_i32 = arith.constant 0 : i32
    %c0_i32_0 = arith.constant 0 : i32
    %c0_i32_1 = arith.constant 0 : i32
    return %c0_i32, %c0_i32_0 : i32, i32
  }
  func.func @transform_6(%arg0: i32) -> (i32, i32) {
    %c0_i32 = arith.constant 0 : i32
    %c0_i32_0 = arith.constant 0 : i32
    %c0_i32_1 = arith.constant 0 : i32
    return %c0_i32, %c0_i32_0 : i32, i32
  }
  func.func @transform_7(%arg0: i32) -> (i32, i32) {
    %c0_i32 = arith.constant 0 : i32
    %c0_i32_0 = arith.constant 0 : i32
    %c0_i32_1 = arith.constant 0 : i32
    return %c0_i32, %c0_i32_0 : i32, i32
  }
  func.func @transform_8(%arg0: i32) -> (i32, i32) {
    %c0_i32 = arith.constant 0 : i32
    %c0_i32_0 = arith.constant 0 : i32
    %c0_i32_1 = arith.constant 0 : i32
    return %c0_i32, %c0_i32_0 : i32, i32
  }
  func.func @transform_9(%arg0: i32) -> (i32, i32) {
    %c0_i32 = arith.constant 0 : i32
    %c0_i32_0 = arith.constant 0 : i32
    %c0_i32_1 = arith.constant 0 : i32
    return %c0_i32, %c0_i32_0 : i32, i32
  }
  func.func @transform_10(%arg0: i32) -> (i32, i32) {
    %c0_i32 = arith.constant 0 : i32
    %c0_i32_0 = arith.constant 0 : i32
    return %arg0, %c0_i32 : i32, i32
  }
}

</mosaic_0001>

<llo_original>
// kernel: score_model.1
$region0: #{score_model.1}
  #allocation0 [shape = 'u32[]', space=smem, size = 0x4, offset = 0x4, fixed_abs, tag = 'smem constant byte address 0x4 - core index']
  #allocation1 [shape = 'u32[144,128]{1,0:T(1,128)}', space=vmem, size = 0x12000, scoped, tag = 'internal scratch']
  %s0 = inlined_call_operand.vmem [shape: bf16[64,8], index: 0, kind: input, shape index: {}]
  %s1 = inlined_call_operand.vmem [shape: bf16[128,4], index: 1, kind: input, shape index: {}]
  %s2 = inlined_call_operand.vmem [shape: s32[128,1], index: 2, kind: input, shape index: {}]
  %s3 = inlined_call_operand.vmem [shape: s32[128,1], index: 3, kind: input, shape index: {}]
  %s4 = inlined_call_operand.vmem [shape: bf16[8,32,32], index: 4, kind: input, shape index: {}]
  %s5 = inlined_call_operand.vmem [shape: f32[9,32], index: 5, kind: input, shape index: {}]
  %s6 = inlined_call_operand.vmem [shape: bf16[8,32], index: 6, kind: input, shape index: {}]
  %s7 = inlined_call_operand.vmem [shape: bf16[4,32], index: 7, kind: input, shape index: {}]
  %s8 = inlined_call_operand.vmem [shape: bf16[32,128], index: 8, kind: input, shape index: {}]
  %s9 = inlined_call_operand.vmem [shape: f32[1,128], index: 9, kind: input, shape index: {}]
  %s10 = inlined_call_operand.vmem [shape: f32[64,128], index: 10, kind: output, shape index: {}]
  %s11 = sld [smem:[#allocation0]]
  $region73: #{score_model.1} parent=0
    _
  %s13 = ssub.s32 1, %s11
  %s14 = scalar_select 0, %s13, %s11
  loop: start=0, step=1, limit=4
  $region2: #{score_model.1} parent=0 // loop_pre_header
    _
  $region3: #{score_model.1} parent=0 // loop_header
    %s16 = sphi 0, %s20
    %p17 = scmp.ge.s32.totalorder %s16, 4
    %s26 = sphi 0, %s28
    %s29 = sphi 0, %s26
    %s30 = sphi 0, %s29
    %s46 = sphi 0, %s30
    %s52 = sphi 0, %s54
    %s55 = sphi 0, %s52
    %s56 = sphi 0, %s55
    %s72 = sphi 0, %s56
    %s78 = sphi 0, %s80
    %s81 = sphi 0, %s78
    %s82 = sphi 0, %s81
    %s98 = sphi 0, %s82
    %s104 = sphi 0, %s106
    %s107 = sphi 0, %s104
    %s108 = sphi 0, %s107
    %s124 = sphi 0, %s108
    %s128 = sphi 0, %s128
    %s130 = sphi 0, %s128
    %s131 = sphi 0, %s130
    %s145 = sphi 0, %s131
    %s149 = sphi 0, %s149
    %s151 = sphi 0, %s149
    %s152 = sphi 0, %s151
    %s166 = sphi 0, %s152
    %s170 = sphi 0, %s170
    %s172 = sphi 0, %s170
    %s173 = sphi 0, %s172
    %s187 = sphi 0, %s173
    %s191 = sphi 0, %s191
    %s193 = sphi 0, %s191
    %s194 = sphi 0, %s193
    %s208 = sphi 0, %s194
    %s212 = sphi 0, %s212
    %s214 = sphi 0, %s212
    %s215 = sphi 0, %s214
    %s229 = sphi 0, %s215
    %s233 = sphi 0, %s233
    %s235 = sphi 0, %s233
    %s236 = sphi 0, %s235
    %s250 = sphi 0, %s236
    %s256 = sphi 0, %s258
    %s259 = sphi 0, %s256
    %s260 = sphi 0, %s259
    %s276 = sphi 0, %s260
  $region4: #{score_model.1} parent=0 // loop_header_branch
    %19 = sbr.rel (%p17) target = $region8
  $region5: #{score_model.1} parent=0 // loop_body
    %s21 = ssub.s32 %s16, 1
    %s22 = ssub.s32 %s16, 2
    %s23 = sadd.s32 %s16, 1
    %s24 = ssub.s32 %s16, %s23
    %p25 = scmp.eq.s32.totalorder %s24, 0
    %s27 = sadd.s32 %s26, 1
    %s28 = scalar_select %p25, %s26, %s27
    %p31 = pneg %p25
    %p32 = scmp.eq.s32.totalorder %s16, 1
    %p33 = por %p31, %p32
    %p34 = scmp.ne.s32.totalorder %s26, %s29
    %p35 = scmp.eq.s32.totalorder %s16, 0
    %p36 = por %p34, %p35
    %p37 = scmp.ne.s32.totalorder %s26, %s29
    %p38 = scmp.eq.s32.totalorder %s21, 1
    %p39 = por %p37, %p38
    %p40 = scmp.ne.s32.totalorder %s29, %s30
    %p41 = scmp.eq.s32.totalorder %s21, 0
    %p42 = por %p40, %p41
    %p43 = scmp.ne.s32.totalorder %s29, %s30
    %p44 = scmp.eq.s32.totalorder %s22, 1
    %p45 = por %p43, %p44
    %p47 = scmp.ne.s32.totalorder %s30, %s46
    %p48 = scmp.eq.s32.totalorder %s22, 0
    %p49 = por %p47, %p48
    %s50 = ssub.s32 %s16, %s23
    %p51 = scmp.eq.s32.totalorder %s50, 0
    %s53 = sadd.s32 %s52, 1
    %s54 = scalar_select %p51, %s52, %s53
    %p57 = pneg %p51
    %p58 = scmp.eq.s32.totalorder %s16, 1
    %p59 = por %p57, %p58
    %p60 = scmp.ne.s32.totalorder %s52, %s55
    %p61 = scmp.eq.s32.totalorder %s16, 0
    %p62 = por %p60, %p61
    %p63 = scmp.ne.s32.totalorder %s52, %s55
    %p64 = scmp.eq.s32.totalorder %s21, 1
    %p65 = por %p63, %p64
    %p66 = scmp.ne.s32.totalorder %s55, %s56
    %p67 = scmp.eq.s32.totalorder %s21, 0
    %p68 = por %p66, %p67
    %p69 = scmp.ne.s32.totalorder %s55, %s56
    %p70 = scmp.eq.s32.totalorder %s22, 1
    %p71 = por %p69, %p70
    %p73 = scmp.ne.s32.totalorder %s56, %s72
    %p74 = scmp.eq.s32.totalorder %s22, 0
    %p75 = por %p73, %p74
    %s76 = ssub.s32 %s16, %s23
    %p77 = scmp.eq.s32.totalorder %s76, 0
    %s79 = sadd.s32 %s78, 1
    %s80 = scalar_select %p77, %s78, %s79
    %p83 = pneg %p77
    %p84 = scmp.eq.s32.totalorder %s16, 1
    %p85 = por %p83, %p84
    %p86 = scmp.ne.s32.totalorder %s78, %s81
    %p87 = scmp.eq.s32.totalorder %s16, 0
    %p88 = por %p86, %p87
    %p89 = scmp.ne.s32.totalorder %s78, %s81
    %p90 = scmp.eq.s32.totalorder %s21, 1
    %p91 = por %p89, %p90
    %p92 = scmp.ne.s32.totalorder %s81, %s82
    %p93 = scmp.eq.s32.totalorder %s21, 0
    %p94 = por %p92, %p93
    %p95 = scmp.ne.s32.totalorder %s81, %s82
    %p96 = scmp.eq.s32.totalorder %s22, 1
    %p97 = por %p95, %p96
    %p99 = scmp.ne.s32.totalorder %s82, %s98
    %p100 = scmp.eq.s32.totalorder %s22, 0
    %p101 = por %p99, %p100
    %s102 = ssub.s32 %s16, %s23
    %p103 = scmp.eq.s32.totalorder %s102, 0
    %s105 = sadd.s32 %s104, 1
    %s106 = scalar_select %p103, %s104, %s105
    %p109 = pneg %p103
    %p110 = scmp.eq.s32.totalorder %s16, 1
    %p111 = por %p109, %p110
    %p112 = scmp.ne.s32.totalorder %s104, %s107
    %p113 = scmp.eq.s32.totalorder %s16, 0
    %p114 = por %p112, %p113
    %p115 = scmp.ne.s32.totalorder %s104, %s107
    %p116 = scmp.eq.s32.totalorder %s21, 1
    %p117 = por %p115, %p116
    %p118 = scmp.ne.s32.totalorder %s107, %s108
    %p119 = scmp.eq.s32.totalorder %s21, 0
    %p120 = por %p118, %p119
    %p121 = scmp.ne.s32.totalorder %s107, %s108
    %p122 = scmp.eq.s32.totalorder %s22, 1
    %p123 = por %p121, %p122
    %p125 = scmp.ne.s32.totalorder %s108, %s124
    %p126 = scmp.eq.s32.totalorder %s22, 0
    %p127 = por %p125, %p126
    %s129 = sadd.s32 %s128, 1
    %p132 = scmp.eq.s32.totalorder %s16, 1
    %p133 = scmp.ne.s32.totalorder %s128, %s130
    %p134 = scmp.eq.s32.totalorder %s16, 0
    %p135 = por %p133, %p134
    %p136 = scmp.ne.s32.totalorder %s128, %s130
    %p137 = scmp.eq.s32.totalorder %s21, 1
    %p138 = por %p136, %p137
    %p139 = scmp.ne.s32.totalorder %s130, %s131
    %p140 = scmp.eq.s32.totalorder %s21, 0
    %p141 = por %p139, %p140
    %p142 = scmp.ne.s32.totalorder %s130, %s131
    %p143 = scmp.eq.s32.totalorder %s22, 1
    %p144 = por %p142, %p143
    %p146 = scmp.ne.s32.totalorder %s131, %s145
    %p147 = scmp.eq.s32.totalorder %s22, 0
    %p148 = por %p146, %p147
    %s150 = sadd.s32 %s149, 1
    %p153 = scmp.eq.s32.totalorder %s16, 1
    %p154 = scmp.ne.s32.totalorder %s149, %s151
    %p155 = scmp.eq.s32.totalorder %s16, 0
    %p156 = por %p154, %p155
    %p157 = scmp.ne.s32.totalorder %s149, %s151
    %p158 = scmp.eq.s32.totalorder %s21, 1
    %p159 = por %p157, %p158
    %p160 = scmp.ne.s32.totalorder %s151, %s152
    %p161 = scmp.eq.s32.totalorder %s21, 0
    %p162 = por %p160, %p161
    %p163 = scmp.ne.s32.totalorder %s151, %s152
    %p164 = scmp.eq.s32.totalorder %s22, 1
    %p165 = por %p163, %p164
    %p167 = scmp.ne.s32.totalorder %s152, %s166
    %p168 = scmp.eq.s32.totalorder %s22, 0
    %p169 = por %p167, %p168
    %s171 = sadd.s32 %s170, 1
    %p174 = scmp.eq.s32.totalorder %s16, 1
    %p175 = scmp.ne.s32.totalorder %s170, %s172
    %p176 = scmp.eq.s32.totalorder %s16, 0
    %p177 = por %p175, %p176
    %p178 = scmp.ne.s32.totalorder %s170, %s172
    %p179 = scmp.eq.s32.totalorder %s21, 1
    %p180 = por %p178, %p179
    %p181 = scmp.ne.s32.totalorder %s172, %s173
    %p182 = scmp.eq.s32.totalorder %s21, 0
    %p183 = por %p181, %p182
    %p184 = scmp.ne.s32.totalorder %s172, %s173
    %p185 = scmp.eq.s32.totalorder %s22, 1
    %p186 = por %p184, %p185
    %p188 = scmp.ne.s32.totalorder %s173, %s187
    %p189 = scmp.eq.s32.totalorder %s22, 0
    %p190 = por %p188, %p189
    %s192 = sadd.s32 %s191, 1
    %p195 = scmp.eq.s32.totalorder %s16, 1
    %p196 = scmp.ne.s32.totalorder %s191, %s193
    %p197 = scmp.eq.s32.totalorder %s16, 0
    %p198 = por %p196, %p197
    %p199 = scmp.ne.s32.totalorder %s191, %s193
    %p200 = scmp.eq.s32.totalorder %s21, 1
    %p201 = por %p199, %p200
    %p202 = scmp.ne.s32.totalorder %s193, %s194
    %p203 = scmp.eq.s32.totalorder %s21, 0
    %p204 = por %p202, %p203
    %p205 = scmp.ne.s32.totalorder %s193, %s194
    %p206 = scmp.eq.s32.totalorder %s22, 1
    %p207 = por %p205, %p206
    %p209 = scmp.ne.s32.totalorder %s194, %s208
    %p210 = scmp.eq.s32.totalorder %s22, 0
    %p211 = por %p209, %p210
    %s213 = sadd.s32 %s212, 1
    %p216 = scmp.eq.s32.totalorder %s16, 1
    %p217 = scmp.ne.s32.totalorder %s212, %s214
    %p218 = scmp.eq.s32.totalorder %s16, 0
    %p219 = por %p217, %p218
    %p220 = scmp.ne.s32.totalorder %s212, %s214
    %p221 = scmp.eq.s32.totalorder %s21, 1
    %p222 = por %p220, %p221
    %p223 = scmp.ne.s32.totalorder %s214, %s215
    %p224 = scmp.eq.s32.totalorder %s21, 0
    %p225 = por %p223, %p224
    %p226 = scmp.ne.s32.totalorder %s214, %s215
    %p227 = scmp.eq.s32.totalorder %s22, 1
    %p228 = por %p226, %p227
    %p230 = scmp.ne.s32.totalorder %s215, %s229
    %p231 = scmp.eq.s32.totalorder %s22, 0
    %p232 = por %p230, %p231
    %s234 = sadd.s32 %s233, 1
    %p237 = scmp.eq.s32.totalorder %s16, 1
    %p238 = scmp.ne.s32.totalorder %s233, %s235
    %p239 = scmp.eq.s32.totalorder %s16, 0
    %p240 = por %p238, %p239
    %p241 = scmp.ne.s32.totalorder %s233, %s235
    %p242 = scmp.eq.s32.totalorder %s21, 1
    %p243 = por %p241, %p242
    %p244 = scmp.ne.s32.totalorder %s235, %s236
    %p245 = scmp.eq.s32.totalorder %s21, 0
    %p246 = por %p244, %p245
    %p247 = scmp.ne.s32.totalorder %s235, %s236
    %p248 = scmp.eq.s32.totalorder %s22, 1
    %p249 = por %p247, %p248
    %p251 = scmp.ne.s32.totalorder %s236, %s250
    %p252 = scmp.eq.s32.totalorder %s22, 0
    %p253 = por %p251, %p252
    %s254 = ssub.s32 %s16, %s23
    %p255 = scmp.eq.s32.totalorder %s254, 0
    %s257 = sadd.s32 %s256, 1
    %s258 = scalar_select %p255, %s256, %s257
    %p261 = pneg %p255
    %p262 = scmp.eq.s32.totalorder %s16, 1
    %p263 = por %p261, %p262
    %p264 = scmp.ne.s32.totalorder %s256, %s259
    %p265 = scmp.eq.s32.totalorder %s16, 0
    %p266 = por %p264, %p265
    %p267 = scmp.ne.s32.totalorder %s256, %s259
    %p268 = scmp.eq.s32.totalorder %s21, 1
    %p269 = por %p267, %p268
    %p270 = scmp.ne.s32.totalorder %s259, %s260
    %p271 = scmp.eq.s32.totalorder %s21, 0
    %p272 = por %p270, %p271
    %p273 = scmp.ne.s32.totalorder %s259, %s260
    %p274 = scmp.eq.s32.totalorder %s22, 1
    %p275 = por %p273, %p274
    %p277 = scmp.ne.s32.totalorder %s260, %s276
    %p278 = scmp.eq.s32.totalorder %s22, 0
    %p279 = por %p277, %p278
    %p280 = scmp.le.s32.totalorder 1, %s16
    %p281 = scmp.lt.s32.totalorder %s16, 3
    %p282 = pnand %p280, %p281
    %p283 = pneg %p282
    // Predicated region
    $region9: #{score_model.1} parent=5 // pred_check
      _
    $region10: #{score_model.1} parent=5 // pred_check_branch
      %285 = sbr.rel (%p282) target = $region12
    $region11: #{score_model.1} parent=5 // pred_region
      %s286 = ssub.s32 %s16, 1
      // Predicated region
      $region13: #{score_model.1} parent=11 // pred_check
        %p287 = pneg %p141
      $region14: #{score_model.1} parent=11 // pred_check_branch
        %289 = sbr.rel (%p287) target = $region16
      $region15: #{score_model.1} parent=11 // pred_region
        _
      $region16: #{score_model.1} parent=11 // pred_fallthru
        _
      // Predicated region
      $region17: #{score_model.1} parent=11 // pred_check
        %p290 = pneg %p162
      $region18: #{score_model.1} parent=11 // pred_check_branch
        %292 = sbr.rel (%p290) target = $region20
      $region19: #{score_model.1} parent=11 // pred_region
        _
      $region20: #{score_model.1} parent=11 // pred_fallthru
        _
      // Predicated region
      $region21: #{score_model.1} parent=11 // pred_check
        %p293 = pneg %p183
      $region22: #{score_model.1} parent=11 // pred_check_branch
        %295 = sbr.rel (%p293) target = $region24
      $region23: #{score_model.1} parent=11 // pred_region
        _
      $region24: #{score_model.1} parent=11 // pred_fallthru
        _
      // Predicated region
      $region25: #{score_model.1} parent=11 // pred_check
        %p296 = pneg %p204
      $region26: #{score_model.1} parent=11 // pred_check_branch
        %298 = sbr.rel (%p296) target = $region28
      $region27: #{score_model.1} parent=11 // pred_region
        _
      $region28: #{score_model.1} parent=11 // pred_fallthru
        _
      // Predicated region
      $region29: #{score_model.1} parent=11 // pred_check
        %p299 = pneg %p225
      $region30: #{score_model.1} parent=11 // pred_check_branch
        %301 = sbr.rel (%p299) target = $region32
      $region31: #{score_model.1} parent=11 // pred_region
        _
      $region32: #{score_model.1} parent=11 // pred_fallthru
        _
      // Predicated region
      $region33: #{score_model.1} parent=11 // pred_check
        %p302 = pneg %p246
      $region34: #{score_model.1} parent=11 // pred_check_branch
        %304 = sbr.rel (%p302) target = $region36
      $region35: #{score_model.1} parent=11 // pred_region
        _
      $region36: #{score_model.1} parent=11 // pred_fallthru
        _
    $region12: #{score_model.1} parent=5 // pred_fallthru
      _
    %p305 = scmp.lt.s32.totalorder %s16, 2
    // Predicated region
    $region37: #{score_model.1} parent=5 // pred_check
      %p306 = pneg %p305
    $region38: #{score_model.1} parent=5 // pred_check_branch
      %308 = sbr.rel (%p306) target = $region40
    $region39: #{score_model.1} parent=5 // pred_region
      // Predicated region
      $region41: #{score_model.1} parent=39 // pred_check
        %p309 = pneg %p36
      $region42: #{score_model.1} parent=39 // pred_check_branch
        %311 = sbr.rel (%p309) target = $region44
      $region43: #{score_model.1} parent=39 // pred_region
        %s312 = smul.u32 4, %s16
        %p313 = scmp.lt.s32.totalorder %s312, 7
        %s314 = scalar_select %p313, %s312, 7
        %s315 = smul.addr %s314, 4
        %s316 = scalar_lea.vmem %s0, %s315
        %s317 = smul.u32 4, %s16
      $region44: #{score_model.1} parent=39 // pred_fallthru
        _
      // Predicated region
      $region45: #{score_model.1} parent=39 // pred_check
        %p318 = pneg %p62
      $region46: #{score_model.1} parent=39 // pred_check_branch
        %320 = sbr.rel (%p318) target = $region48
      $region47: #{score_model.1} parent=39 // pred_region
        %s321 = smul.u32 8, %s16
        %p322 = scmp.lt.s32.totalorder %s321, 15
        %s323 = scalar_select %p322, %s321, 15
        %s324 = smul.addr %s323, 4
        %s325 = scalar_lea.vmem %s1, %s324
        %s326 = smul.u32 8, %s16
      $region48: #{score_model.1} parent=39 // pred_fallthru
        _
      // Predicated region
      $region49: #{score_model.1} parent=39 // pred_check
        %p327 = pneg %p88
      $region50: #{score_model.1} parent=39 // pred_check_branch
        %329 = sbr.rel (%p327) target = $region52
      $region51: #{score_model.1} parent=39 // pred_region
        %s330 = smul.u32 8, %s16
        %p331 = scmp.lt.s32.totalorder %s330, 15
        %s332 = scalar_select %p331, %s330, 15
        %s333 = smul.addr %s332, 8
        %s334 = scalar_lea.vmem %s2, %s333
        %s335 = smul.u32 8, %s16
      $region52: #{score_model.1} parent=39 // pred_fallthru
        _
      // Predicated region
      $region53: #{score_model.1} parent=39 // pred_check
        %p336 = pneg %p114
      $region54: #{score_model.1} parent=39 // pred_check_branch
        %338 = sbr.rel (%p336) target = $region56
      $region55: #{score_model.1} parent=39 // pred_region
        %s339 = smul.u32 8, %s16
        %p340 = scmp.lt.s32.totalorder %s339, 15
        %s341 = scalar_select %p340, %s339, 15
        %s342 = smul.addr %s341, 8
        %s343 = scalar_lea.vmem %s3, %s342
        %s344 = smul.u32 8, %s16
      $region56: #{score_model.1} parent=39 // pred_fallthru
        _
    $region40: #{score_model.1} parent=5 // pred_fallthru
      _
    %p345 = scmp.le.s32.totalorder 1, %s16
    %p346 = scmp.lt.s32.totalorder %s16, 3
    %p347 = pnand %p345, %p346
    %p348 = pneg %p347
    // Predicated region
    $region57: #{score_model.1} parent=5 // pred_check
      _
    $region58: #{score_model.1} parent=5 // pred_check_branch
      %350 = sbr.rel (%p347) target = $region60
    $region59: #{score_model.1} parent=5 // pred_region
      %s351 = ssub.s32 %s16, 1
      %s352 = smul.u32 4, %s21
      %p353 = scmp.lt.s32.totalorder %s352, 7
      %s354 = scalar_select %p353, %s352, 7
      %s355 = smul.addr %s354, 4
      %s356 = scalar_lea.vmem %s0, %s355
      %p357 = pneg %p42
      %p358 = pneg %p39
      %s359 = smul.u32 8, %s21
      %p360 = scmp.lt.s32.totalorder %s359, 15
      %s361 = scalar_select %p360, %s359, 15
      %s362 = smul.addr %s361, 4
      %s363 = scalar_lea.vmem %s1, %s362
      %p364 = pneg %p68
      %p365 = pneg %p65
      %s366 = smul.u32 8, %s21
      %p367 = scmp.lt.s32.totalorder %s366, 15
      %s368 = scalar_select %p367, %s366, 15
      %s369 = smul.addr %s368, 8
      %s370 = scalar_lea.vmem %s2, %s369
      %p371 = pneg %p94
      %p372 = pneg %p91
      %s373 = smul.u32 8, %s21
      %p374 = scmp.lt.s32.totalorder %s373, 15
      %s375 = scalar_select %p374, %s373, 15
      %s376 = smul.addr %s375, 8
      %s377 = scalar_lea.vmem %s3, %s376
      %p378 = pneg %p120
      %p379 = pneg %p117
      %p380 = pneg %p141
      %p381 = pneg %p138
      %p382 = pneg %p162
      %p383 = pneg %p159
      %p384 = pneg %p183
      %p385 = pneg %p180
      %p386 = pneg %p204
      %p387 = pneg %p201
      %p388 = pneg %p225
      %p389 = pneg %p222
      %p390 = pneg %p246
      %p391 = pneg %p243
      %p392 = pneg %p272
      %p393 = pneg %p269
      %s394 = smul.u32 4, %s21
      %p395 = scmp.lt.s32.totalorder %s394, 7
      %s396 = scalar_select %p395, %s394, 7
      %s397 = smul.addr %s396, 8
      %s398 = scalar_lea.vmem %s10, %s397
      %s399 = smul.u32 4, %s21
      %p400 = scmp.lt.s32.totalorder %s399, 7
      %s401 = scalar_select %p400, %s399, 7
      %s402 = smul.addr %s401, 4
      %s403 = scalar_lea.vmem %s0, %s402
      %s404 = smul.u32 4, %s21
      %s405 = smul.u32 8, %s21
      %p406 = scmp.lt.s32.totalorder %s405, 15
      %s407 = scalar_select %p406, %s405, 15
      %s408 = smul.addr %s407, 4
      %s409 = scalar_lea.vmem %s1, %s408
      %s410 = smul.u32 8, %s21
      %s411 = smul.u32 8, %s21
      %p412 = scmp.lt.s32.totalorder %s411, 15
      %s413 = scalar_select %p412, %s411, 15
      %s414 = smul.addr %s413, 8
      %s415 = scalar_lea.vmem %s2, %s414
      %s416 = smul.u32 8, %s21
      %s417 = smul.u32 8, %s21
      %p418 = scmp.lt.s32.totalorder %s417, 15
      %s419 = scalar_select %p418, %s417, 15
      %s420 = smul.addr %s419, 8
      %s421 = scalar_lea.vmem %s3, %s420
      %s422 = smul.u32 8, %s21
      %s423 = smul.u32 4, %s21
      %p424 = scmp.lt.s32.totalorder %s423, 7
      %s425 = scalar_select %p424, %s423, 7
      %s426 = smul.addr %s425, 8
      %s427 = scalar_lea.vmem %s10, %s426
      %s428 = smul.u32 4, %s21
      %v430 = vld [vmem:[%s403] sm:$0xf]
      %v431 = vld [vmem:[%s403 + $0x4] sm:$0xf]
      %v432 = vld [vmem:[%s403 + $0x8] sm:$0xf]
      %v433 = vld [vmem:[%s403 + $0xc] sm:$0xf]
      %v434 = vld [vmem:[%s409] sm:$0xf]
      %v435 = vld [vmem:[%s409 + $0x4] sm:$0xf]
      %v436 = vld [vmem:[%s409 + $0x8] sm:$0xf]
      %v437 = vld [vmem:[%s409 + $0xc] sm:$0xf]
      %v438 = vld [vmem:[%s409 + $0x10] sm:$0xf]
      %v439 = vld [vmem:[%s409 + $0x14] sm:$0xf]
      %v440 = vld [vmem:[%s409 + $0x18] sm:$0xf]
      %v441 = vld [vmem:[%s409 + $0x1c] sm:$0xf]
      %v442 = vld [vmem:[%s415] sm:$0xff]
      %v443 = vld [vmem:[%s415 + $0x8] sm:$0xff]
      %v444 = vld [vmem:[%s415 + $0x10] sm:$0xff]
      %v445 = vld [vmem:[%s415 + $0x18] sm:$0xff]
      %v446 = vld [vmem:[%s415 + $0x20] sm:$0xff]
      %v447 = vld [vmem:[%s415 + $0x28] sm:$0xff]
      %v448 = vld [vmem:[%s415 + $0x30] sm:$0xff]
      %v449 = vld [vmem:[%s415 + $0x38] sm:$0xff]
      %v450 = vld [vmem:[%s421] sm:$0xff]
      %v451 = vld [vmem:[%s421 + $0x8] sm:$0xff]
      %v452 = vld [vmem:[%s421 + $0x10] sm:$0xff]
      %v453 = vld [vmem:[%s421 + $0x18] sm:$0xff]
      %v454 = vld [vmem:[%s421 + $0x20] sm:$0xff]
      %v455 = vld [vmem:[%s421 + $0x28] sm:$0xff]
      %v456 = vld [vmem:[%s421 + $0x30] sm:$0xff]
      %v457 = vld [vmem:[%s421 + $0x38] sm:$0xff]
      %v458 = vld [vmem:[%s6] sm:$0xf]
      %v459 = vld [vmem:[%s5] sm:$0x1]
      %v460 = vlaneseq
      %v461 = vshrl.u32 %v460, 7
      %v462 = vsub.s32 0, %v461
      %v463 = vrot.slane %v459, %v462
      %v468 = vunpack.c.l.b16 %v430
      %v469 = vunpack.c.l.b16 %v431
      %v470 = vunpack.c.l.b16 %v432
      %v471 = vunpack.c.l.b16 %v433
      %v472 = vpack.c.b16 %v469, %v468
      %v473 = vpack.c.b16 %v471, %v470
      %vm474 = vcmask 64512
      %v476 = vsel %vm474, %v472, 0
      %v479 = vsel %vm474, %v473, 0
      %vm481 = vcmask 1043456
      %v483 = vsel %vm481, %v458, 0
      %485 = vmatprep.subr.bf16.mxu0 0
      %486 = vmatpush1.bf16.msra.mxu0 %v483
      %487 = vmatprep.subr.bf16.mxu0 0
      %488 = vmatpush1.bf16.msra.mxu0 0
      %489 = vmatprep.subr.bf16.mxu0 0
      %490 = vmatpush1.bf16.msra.mxu0 0
      %491 = vmatprep.subr.bf16.mxu0 0
      %492 = vmatpush1.bf16.msra.mxu0 0
      %493 = vmatprep.subr.bf16.mxu0 0
      %494 = vmatpush1.bf16.msra.mxu0 0
      %495 = vmatprep.subr.bf16.mxu0 0
      %496 = vmatpush1.bf16.msra.mxu0 0
      %497 = vmatprep.subr.bf16.mxu0 0
      %498 = vmatpush1.bf16.msra.mxu0 0
      %499 = vmatprep.subr.bf16.mxu0 0
      %500 = vmatpush1.bf16.msra.mxu0 0
      %501 = vmatprep.subr.bf16.mxu0 0
      %502 = vmatpush1.bf16.msra.mxu0 0
      %503 = vmatprep.subr.bf16.mxu0 0
      %504 = vmatpush1.bf16.msra.mxu0 0
      %505 = vmatprep.subr.bf16.mxu0 0
      %506 = vmatpush1.bf16.msra.mxu0 0
      %507 = vmatprep.subr.bf16.mxu0 0
      %508 = vmatpush1.bf16.msra.mxu0 0
      %509 = vmatprep.subr.bf16.mxu0 0
      %510 = vmatpush1.bf16.msra.mxu0 0
      %511 = vmatprep.subr.bf16.mxu0 0
      %512 = vmatpush1.bf16.msra.mxu0 0
      %513 = vmatprep.subr.bf16.mxu0 0
      %514 = vmatpush1.bf16.msra.mxu0 0
      %515 = vmatprep.subr.bf16.mxu0 0
      %516 = vmatpush1.bf16.msra.mxu0 0
      %517 = vmatprep.mubr.bf16.mxu0 0
      %518 = vmatmul.mubr.bf16.gmra.mrb[0].mxu0 %v476
      %v519 = vpop.f32.mrb[0].mxu0
      %v520 = vadd.f32 %v463, %v519
      %v521 = vpop.f32.mrb[0].mxu0
      %v522 = vpop.f32.mrb[0].mxu0
      %v523 = vadd.f32 %v463, %v522
      %v524 = vpop.f32.mrb[0].mxu0
      %525 = vmatprep.mubr.bf16.mxu0 0
      %526 = vmatmul.mubr.bf16.gmra.mrb[0].mxu0 %v479
      %v527 = vpop.f32.mrb[0].mxu0
      %v528 = vadd.f32 %v463, %v527
      %v529 = vpop.f32.mrb[0].mxu0
      %v530 = vpop.f32.mrb[0].mxu0
      %v531 = vadd.f32 %v463, %v530
      %v532 = vpop.f32.mrb[0].mxu0
      %533 = vdwg.mxu0
      %v534 = vmax.f32 %v520, 0.0
      %v535 = vmax.f32 %v523, 0.0
      %v536 = vmax.f32 %v528, 0.0
      %v537 = vmax.f32 %v531, 0.0
      %v538 = vld [vmem:[%s4] sm:$0xf]
      %v539 = vld [vmem:[%s4 + $0x4] sm:$0xf]
      %v540 = vld [vmem:[%s4 + $0x8] sm:$0xf]
      %v541 = vld [vmem:[%s4 + $0xc] sm:$0xf]
      %v542 = vpack.c.bf16 %v535, %v534
      %v543 = vpack.c.bf16 %v537, %v536
      %v544 = vld [vmem:[%s5 + $0x1] sm:$0x1]
      %v545 = vlaneseq
      %v546 = vshrl.u32 %v545, 7
      %v547 = vsub.s32 0, %v546
      %v548 = vrot.slane %v544, %v547
      %v553 = vunpack.c.l.b16 %v538
      %v554 = vunpack.c.l.b16 %v539
      %v555 = vunpack.c.l.b16 %v540
      %v556 = vunpack.c.l.b16 %v541
      %v557 = vpack.c.b16 %v554, %v553
      %v558 = vpack.c.b16 %v556, %v555
      %vm561 = vcmask 261120
      %v563 = vsel %vm561, %v542, 0
      %v566 = vsel %vm561, %v543, 0
      %568 = vmatprep.subr.bf16.mxu0 0
      %569 = vmatpush1.bf16.msra.mxu0 %v557
      %570 = vmatprep.subr.bf16.mxu0 0
      %571 = vmatpush1.bf16.msra.mxu0 %v558
      %572 = vmatprep.subr.bf16.mxu0 0
      %573 = vmatpush1.bf16.msra.mxu0 0
      %574 = vmatprep.subr.bf16.mxu0 0
      %575 = vmatpush1.bf16.msra.mxu0 0
      %576 = vmatprep.subr.bf16.mxu0 0
      %577 = vmatpush1.bf16.msra.mxu0 0
      %578 = vmatprep.subr.bf16.mxu0 0
      %579 = vmatpush1.bf16.msra.mxu0 0
      %580 = vmatprep.subr.bf16.mxu0 0
      %581 = vmatpush1.bf16.msra.mxu0 0
      %582 = vmatprep.subr.bf16.mxu0 0
      %583 = vmatpush1.bf16.msra.mxu0 0
      %584 = vmatprep.subr.bf16.mxu0 0
      %585 = vmatpush1.bf16.msra.mxu0 0
      %586 = vmatprep.subr.bf16.mxu0 0
      %587 = vmatpush1.bf16.msra.mxu0 0
      %588 = vmatprep.subr.bf16.mxu0 0
      %589 = vmatpush1.bf16.msra.mxu0 0
      %590 = vmatprep.subr.bf16.mxu0 0
      %591 = vmatpush1.bf16.msra.mxu0 0
      %592 = vmatprep.subr.bf16.mxu0 0
      %593 = vmatpush1.bf16.msra.mxu0 0
      %594 = vmatprep.subr.bf16.mxu0 0
      %595 = vmatpush1.bf16.msra.mxu0 0
      %596 = vmatprep.subr.bf16.mxu0 0
      %597 = vmatpush1.bf16.msra.mxu0 0
      %598 = vmatprep.subr.bf16.mxu0 0
      %599 = vmatpush1.bf16.msra.mxu0 0
      %600 = vmatprep.mubr.bf16.mxu0 0
      %601 = vmatmul.mubr.bf16.gmra.mrb[0].mxu0 %v563
      %v602 = vpop.f32.mrb[0].mxu0
      %v603 = vadd.f32 %v548, %v602
      %v604 = vpop.f32.mrb[0].mxu0
      %v605 = vpop.f32.mrb[0].mxu0
      %v606 = vadd.f32 %v548, %v605
      %v607 = vpop.f32.mrb[0].mxu0
      %608 = vmatprep.mubr.bf16.mxu0 0
      %609 = vmatmul.mubr.bf16.gmra.mrb[0].mxu0 %v566
      %v610 = vpop.f32.mrb[0].mxu0
      %v611 = vadd.f32 %v548, %v610
      %v612 = vpop.f32.mrb[0].mxu0
      %v613 = vpop.f32.mrb[0].mxu0
      %v614 = vadd.f32 %v548, %v613
      %v615 = vpop.f32.mrb[0].mxu0
      %616 = vdwg.mxu0
      %v617 = vld [vmem:[%s7] sm:$0x3]
      %v618 = vld [vmem:[%s5 + $0x2] sm:$0x1]
      %v619 = vlaneseq
      %v620 = vshrl.u32 %v619, 7
      %v621 = vsub.s32 0, %v620
      %v622 = vrot.slane %v618, %v621
      %v631 = vunpack.c.l.b16 %v434
      %v632 = vunpack.c.l.b16 %v435
      %v633 = vunpack.c.l.b16 %v436
      %v634 = vunpack.c.l.b16 %v437
      %v635 = vunpack.c.l.b16 %v438
      %v636 = vunpack.c.l.b16 %v439
      %v637 = vunpack.c.l.b16 %v440
      %v638 = vunpack.c.l.b16 %v441
      %v639 = vpack.c.b16 %v632, %v631
      %v640 = vpack.c.b16 %v634, %v633
      %v641 = vpack.c.b16 %v636, %v635
      %v642 = vpack.c.b16 %v638, %v637
      %vm643 = vcmask 31744
      %v645 = vsel %vm643, %v639, 0
      %v648 = vsel %vm643, %v640, 0
      %v651 = vsel %vm643, %v641, 0
      %v654 = vsel %vm643, %v642, 0
      %vm656 = vcmask 1041408
      %v658 = vsel %vm656, %v617, 0
      %660 = vmatprep.subr.bf16.mxu0 0
      %661 = vmatpush1.bf16.msra.mxu0 %v658
      %662 = vmatprep.subr.bf16.mxu0 0
      %663 = vmatpush1.bf16.msra.mxu0 0
      %664 = vmatprep.subr.bf16.mxu0 0
      %665 = vmatpush1.bf16.msra.mxu0 0
      %666 = vmatprep.subr.bf16.mxu0 0
      %667 = vmatpush1.bf16.msra.mxu0 0
      %668 = vmatprep.subr.bf16.mxu0 0
      %669 = vmatpush1.bf16.msra.mxu0 0
      %670 = vmatprep.subr.bf16.mxu0 0
      %671 = vmatpush1.bf16.msra.mxu0 0
      %672 = vmatprep.subr.bf16.mxu0 0
      %673 = vmatpush1.bf16.msra.mxu0 0
      %674 = vmatprep.subr.bf16.mxu0 0
      %675 = vmatpush1.bf16.msra.mxu0 0
      %676 = vmatprep.subr.bf16.mxu0 0
      %677 = vmatpush1.bf16.msra.mxu0 0
      %678 = vmatprep.subr.bf16.mxu0 0
      %679 = vmatpush1.bf16.msra.mxu0 0
      %680 = vmatprep.subr.bf16.mxu0 0
      %681 = vmatpush1.bf16.msra.mxu0 0
      %682 = vmatprep.subr.bf16.mxu0 0
      %683 = vmatpush1.bf16.msra.mxu0 0
      %684 = vmatprep.subr.bf16.mxu0 0
      %685 = vmatpush1.bf16.msra.mxu0 0
      %686 = vmatprep.subr.bf16.mxu0 0
      %687 = vmatpush1.bf16.msra.mxu0 0
      %688 = vmatprep.subr.bf16.mxu0 0
      %689 = vmatpush1.bf16.msra.mxu0 0
      %690 = vmatprep.subr.bf16.mxu0 0
      %691 = vmatpush1.bf16.msra.mxu0 0
      %692 = vmatprep.mubr.bf16.mxu0 0
      %693 = vmatmul.mubr.bf16.gmra.mrb[0].mxu0 %v645
      %v694 = vpop.f32.mrb[0].mxu0
      %v695 = vadd.f32 %v622, %v694
      %v696 = vpop.f32.mrb[0].mxu0
      %v697 = vpop.f32.mrb[0].mxu0
      %v698 = vadd.f32 %v622, %v697
      %v699 = vpop.f32.mrb[0].mxu0
      %700 = vmatprep.mubr.bf16.mxu0 0
      %701 = vmatmul.mubr.bf16.gmra.mrb[0].mxu0 %v648
      %v702 = vpop.f32.mrb[0].mxu0
      %v703 = vadd.f32 %v622, %v702
      %v704 = vpop.f32.mrb[0].mxu0
      %v705 = vpop.f32.mrb[0].mxu0
      %v706 = vadd.f32 %v622, %v705
      %v707 = vpop.f32.mrb[0].mxu0
      %708 = vmatprep.mubr.bf16.mxu0 0
      %709 = vmatmul.mubr.bf16.gmra.mrb[0].mxu0 %v651
      %v710 = vpop.f32.mrb[0].mxu0
      %v711 = vadd.f32 %v622, %v710
      %v712 = vpop.f32.mrb[0].mxu0
      %v713 = vpop.f32.mrb[0].mxu0
      %v714 = vadd.f32 %v622, %v713
      %v715 = vpop.f32.mrb[0].mxu0
      %716 = vmatprep.mubr.bf16.mxu0 0
      %717 = vmatmul.mubr.bf16.gmra.mrb[0].mxu0 %v654
      %v718 = vpop.f32.mrb[0].mxu0
      %v719 = vadd.f32 %v622, %v718
      %v720 = vpop.f32.mrb[0].mxu0
      %v721 = vpop.f32.mrb[0].mxu0
      %v722 = vadd.f32 %v622, %v721
      %v723 = vpop.f32.mrb[0].mxu0
      %724 = vdwg.mxu0
      %v725 = vmax.f32 %v695, 0.0
      %v726 = vmax.f32 %v698, 0.0
      %v727 = vmax.f32 %v703, 0.0
      %v728 = vmax.f32 %v706, 0.0
      %v729 = vmax.f32 %v711, 0.0
      %v730 = vmax.f32 %v714, 0.0
      %v731 = vmax.f32 %v719, 0.0
      %v732 = vmax.f32 %v722, 0.0
      %s733 = scalar_lea.vmem %s4, 16
      %v734 = vld [vmem:[%s733] sm:$0xf]
      %v735 = vld [vmem:[%s733 + $0x4] sm:$0xf]
      %v736 = vld [vmem:[%s733 + $0x8] sm:$0xf]
      %v737 = vld [vmem:[%s733 + $0xc] sm:$0xf]
      %v738 = vpack.c.bf16 %v726, %v725
      %v739 = vpack.c.bf16 %v728, %v727
      %v740 = vpack.c.bf16 %v730, %v729
      %v741 = vpack.c.bf16 %v732, %v731
      %v742 = vld [vmem:[%s5 + $0x3] sm:$0x1]
      %v743 = vlaneseq
      %v744 = vshrl.u32 %v743, 7
      %v745 = vsub.s32 0, %v744
      %v746 = vrot.slane %v742, %v745
      %v751 = vunpack.c.l.b16 %v734
      %v752 = vunpack.c.l.b16 %v735
      %v753 = vunpack.c.l.b16 %v736
      %v754 = vunpack.c.l.b16 %v737
      %v755 = vpack.c.b16 %v752, %v751
      %v756 = vpack.c.b16 %v754, %v753
      %v760 = vsel %vm561, %v738, 0
      %v763 = vsel %vm561, %v739, 0
      %v766 = vsel %vm561, %v740, 0
      %v769 = vsel %vm561, %v741, 0
      %771 = vmatprep.subr.bf16.mxu0 0
      %772 = vmatpush1.bf16.msra.mxu0 %v755
      %773 = vmatprep.subr.bf16.mxu0 0
      %774 = vmatpush1.bf16.msra.mxu0 %v756
      %775 = vmatprep.subr.bf16.mxu0 0
      %776 = vmatpush1.bf16.msra.mxu0 0
      %777 = vmatprep.subr.bf16.mxu0 0
      %778 = vmatpush1.bf16.msra.mxu0 0
      %779 = vmatprep.subr.bf16.mxu0 0
      %780 = vmatpush1.bf16.msra.mxu0 0
      %781 = vmatprep.subr.bf16.mxu0 0
      %782 = vmatpush1.bf16.msra.mxu0 0
      %783 = vmatprep.subr.bf16.mxu0 0
      %784 = vmatpush1.bf16.msra.mxu0 0
      %785 = vmatprep.subr.bf16.mxu0 0
      %786 = vmatpush1.bf16.msra.mxu0 0
      %787 = vmatprep.subr.bf16.mxu0 0
      %788 = vmatpush1.bf16.msra.mxu0 0
      %789 = vmatprep.subr.bf16.mxu0 0
      %790 = vmatpush1.bf16.msra.mxu0 0
      %791 = vmatprep.subr.bf16.mxu0 0
      %792 = vmatpush1.bf16.msra.mxu0 0
      %793 = vmatprep.subr.bf16.mxu0 0
      %794 = vmatpush1.bf16.msra.mxu0 0
      %795 = vmatprep.subr.bf16.mxu0 0
      %796 = vmatpush1.bf16.msra.mxu0 0
      %797 = vmatprep.subr.bf16.mxu0 0
      %798 = vmatpush1.bf16.msra.mxu0 0
      %799 = vmatprep.subr.bf16.mxu0 0
      %800 = vmatpush1.bf16.msra.mxu0 0
      %801 = vmatprep.subr.bf16.mxu0 0
      %802 = vmatpush1.bf16.msra.mxu0 0
      %803 = vmatprep.mubr.bf16.mxu0 0
      %804 = vmatmul.mubr.bf16.gmra.mrb[0].mxu0 %v760
      %v805 = vpop.f32.mrb[0].mxu0
      %v806 = vadd.f32 %v746, %v805
      %v807 = vpop.f32.mrb[0].mxu0
      %v808 = vpop.f32.mrb[0].mxu0
      %v809 = vadd.f32 %v746, %v808
      %v810 = vpop.f32.mrb[0].mxu0
      %811 = vmatprep.mubr.bf16.mxu0 0
      %812 = vmatmul.mubr.bf16.gmra.mrb[0].mxu0 %v763
      %v813 = vpop.f32.mrb[0].mxu0
      %v814 = vadd.f32 %v746, %v813
      %v815 = vpop.f32.mrb[0].mxu0
      %v816 = vpop.f32.mrb[0].mxu0
      %v817 = vadd.f32 %v746, %v816
      %v818 = vpop.f32.mrb[0].mxu0
      %819 = vmatprep.mubr.bf16.mxu0 0
      %820 = vmatmul.mubr.bf16.gmra.mrb[0].mxu0 %v766
      %v821 = vpop.f32.mrb[0].mxu0
      %v822 = vadd.f32 %v746, %v821
      %v823 = vpop.f32.mrb[0].mxu0
      %v824 = vpop.f32.mrb[0].mxu0
      %v825 = vadd.f32 %v746, %v824
      %v826 = vpop.f32.mrb[0].mxu0
      %827 = vmatprep.mubr.bf16.mxu0 0
      %828 = vmatmul.mubr.bf16.gmra.mrb[0].mxu0 %v769
      %v829 = vpop.f32.mrb[0].mxu0
      %v830 = vadd.f32 %v746, %v829
      %v831 = vpop.f32.mrb[0].mxu0
      %v832 = vpop.f32.mrb[0].mxu0
      %v833 = vadd.f32 %v746, %v832
      %v834 = vpop.f32.mrb[0].mxu0
      %835 = vdwg.mxu0
      %v836 = vpack.c.bf16 %v606, %v603
      %v837 = vpack.c.bf16 %v614, %v611
      %s838 = scalar_lea.vmem %s4, 32
      %v839 = vld [vmem:[%s838] sm:$0xf]
      %v840 = vld [vmem:[%s838 + $0x4] sm:$0xf]
      %v841 = vld [vmem:[%s838 + $0x8] sm:$0xf]
      %v842 = vld [vmem:[%s838 + $0xc] sm:$0xf]
      %v847 = vunpack.c.l.b16 %v839
      %v848 = vunpack.c.l.b16 %v840
      %v849 = vunpack.c.l.b16 %v841
      %v850 = vunpack.c.l.b16 %v842
      %v851 = vpack.c.b16 %v848, %v847
      %v852 = vpack.c.b16 %v850, %v849
      %v856 = vsel %vm561, %v836, 0
      %v859 = vsel %vm561, %v837, 0
      %861 = vmatprep.subr.bf16.mxu0 0
      %862 = vmatpush1.bf16.msra.mxu0 %v851
      %863 = vmatprep.subr.bf16.mxu0 0
      %864 = vmatpush1.bf16.msra.mxu0 %v852
      %865 = vmatprep.subr.bf16.mxu0 0
      %866 = vmatpush1.bf16.msra.mxu0 0
      %867 = vmatprep.subr.bf16.mxu0 0
      %868 = vmatpush1.bf16.msra.mxu0 0
      %869 = vmatprep.subr.bf16.mxu0 0
      %870 = vmatpush1.bf16.msra.mxu0 0
      %871 = vmatprep.subr.bf16.mxu0 0
      %872 = vmatpush1.bf16.msra.mxu0 0
      %873 = vmatprep.subr.bf16.mxu0 0
      %874 = vmatpush1.bf16.msra.mxu0 0
      %875 = vmatprep.subr.bf16.mxu0 0
      %876 = vmatpush1.bf16.msra.mxu0 0
      %877 = vmatprep.subr.bf16.mxu0 0
      %878 = vmatpush1.bf16.msra.mxu0 0
      %879 = vmatprep.subr.bf16.mxu0 0
      %880 = vmatpush1.bf16.msra.mxu0 0
      %881 = vmatprep.subr.bf16.mxu0 0
      %882 = vmatpush1.bf16.msra.mxu0 0
      %883 = vmatprep.subr.bf16.mxu0 0
      %884 = vmatpush1.bf16.msra.mxu0 0
      %885 = vmatprep.subr.bf16.mxu0 0
      %886 = vmatpush1.bf16.msra.mxu0 0
      %887 = vmatprep.subr.bf16.mxu0 0
      %888 = vmatpush1.bf16.msra.mxu0 0
      %889 = vmatprep.subr.bf16.mxu0 0
      %890 = vmatpush1.bf16.msra.mxu0 0
      %891 = vmatprep.subr.bf16.mxu0 0
      %892 = vmatpush1.bf16.msra.mxu0 0
      %893 = vmatprep.mubr.bf16.mxu0 0
      %894 = vmatmul.mubr.bf16.gmra.mrb[0].mxu0 %v856
      %v895 = vpop.f32.mrb[0].mxu0
      %v896 = vadd.f32 0.0, %v895
      %v897 = vpop.f32.mrb[0].mxu0
      %v898 = vpop.f32.mrb[0].mxu0
      %v899 = vadd.f32 0.0, %v898
      %v900 = vpop.f32.mrb[0].mxu0
      %901 = vmatprep.mubr.bf16.mxu0 0
      %902 = vmatmul.mubr.bf16.gmra.mrb[0].mxu0 %v859
      %v903 = vpop.f32.mrb[0].mxu0
      %v904 = vadd.f32 0.0, %v903
      %v905 = vpop.f32.mrb[0].mxu0
      %v906 = vpop.f32.mrb[0].mxu0
      %v907 = vadd.f32 0.0, %v906
      %v908 = vpop.f32.mrb[0].mxu0
      %909 = vdwg.mxu0
      %s910 = scalar_lea.vmem %s4, 48
      %v911 = vld [vmem:[%s910] sm:$0xf]
      %v912 = vld [vmem:[%s910 + $0x4] sm:$0xf]
      %v913 = vld [vmem:[%s910 + $0x8] sm:$0xf]
      %v914 = vld [vmem:[%s910 + $0xc] sm:$0xf]
      %v919 = vunpack.c.l.b16 %v911
      %v920 = vunpack.c.l.b16 %v912
      %v921 = vunpack.c.l.b16 %v913
      %v922 = vunpack.c.l.b16 %v914
      %v923 = vpack.c.b16 %v920, %v919
      %v924 = vpack.c.b16 %v922, %v921
      %927 = vmatprep.subr.bf16.mxu0 0
      %928 = vmatpush1.bf16.msra.mxu0 %v923
      %929 = vmatprep.subr.bf16.mxu0 0
      %930 = vmatpush1.bf16.msra.mxu0 %v924
      %931 = vmatprep.subr.bf16.mxu0 0
      %932 = vmatpush1.bf16.msra.mxu0 0
      %933 = vmatprep.subr.bf16.mxu0 0
      %934 = vmatpush1.bf16.msra.mxu0 0
      %935 = vmatprep.subr.bf16.mxu0 0
      %936 = vmatpush1.bf16.msra.mxu0 0
      %937 = vmatprep.subr.bf16.mxu0 0
      %938 = vmatpush1.bf16.msra.mxu0 0
      %939 = vmatprep.subr.bf16.mxu0 0
      %940 = vmatpush1.bf16.msra.mxu0 0
      %941 = vmatprep.subr.bf16.mxu0 0
      %942 = vmatpush1.bf16.msra.mxu0 0
      %943 = vmatprep.subr.bf16.mxu0 0
      %944 = vmatpush1.bf16.msra.mxu0 0
      %945 = vmatprep.subr.bf16.mxu0 0
      %946 = vmatpush1.bf16.msra.mxu0 0
      %947 = vmatprep.subr.bf16.mxu0 0
      %948 = vmatpush1.bf16.msra.mxu0 0
      %949 = vmatprep.subr.bf16.mxu0 0
      %950 = vmatpush1.bf16.msra.mxu0 0
      %951 = vmatprep.subr.bf16.mxu0 0
      %952 = vmatpush1.bf16.msra.mxu0 0
      %953 = vmatprep.subr.bf16.mxu0 0
      %954 = vmatpush1.bf16.msra.mxu0 0
      %955 = vmatprep.subr.bf16.mxu0 0
      %956 = vmatpush1.bf16.msra.mxu0 0
      %957 = vmatprep.subr.bf16.mxu0 0
      %958 = vmatpush1.bf16.msra.mxu0 0
      %959 = vmatprep.mubr.bf16.mxu0 0
      %960 = vmatmul.mubr.bf16.gmra.mrb[0].mxu0 %v856
      %v961 = vpop.f32.mrb[0].mxu0
      %v962 = vadd.f32 0.0, %v961
      %v963 = vpop.f32.mrb[0].mxu0
      %v964 = vpop.f32.mrb[0].mxu0
      %v965 = vadd.f32 0.0, %v964
      %v966 = vpop.f32.mrb[0].mxu0
      %967 = vmatprep.mubr.bf16.mxu0 0
      %968 = vmatmul.mubr.bf16.gmra.mrb[0].mxu0 %v859
      %v969 = vpop.f32.mrb[0].mxu0
      %v970 = vadd.f32 0.0, %v969
      %v971 = vpop.f32.mrb[0].mxu0
      %v972 = vpop.f32.mrb[0].mxu0
      %v973 = vadd.f32 0.0, %v972
      %v974 = vpop.f32.mrb[0].mxu0
      %975 = vdwg.mxu0
      %v976 = vlaneseq
      %v977 = vand.u32 %v976, 127
      %978 = vset.pattern.permute.xlu0 0
      %979 = vperm.xlu0 %978, %v442
      %v980 = vpop.permute.xlu0 %979
      %981 = vset.pattern.permute.xlu0 0
      %982 = vperm.xlu0 %981, %v443
      %v983 = vpop.permute.xlu0 %982
      %984 = vset.pattern.permute.xlu0 0
      %985 = vperm.xlu0 %984, %v444
      %v986 = vpop.permute.xlu0 %985
      %987 = vset.pattern.permute.xlu0 0
      %988 = vperm.xlu0 %987, %v445
      %v989 = vpop.permute.xlu0 %988
      %990 = vset.pattern.permute.xlu0 0
      %991 = vperm.xlu0 %990, %v446
      %v992 = vpop.permute.xlu0 %991
      %993 = vset.pattern.permute.xlu0 0
      %994 = vperm.xlu0 %993, %v447
      %v995 = vpop.permute.xlu0 %994
      %996 = vset.pattern.permute.xlu0 0
      %997 = vperm.xlu0 %996, %v448
      %v998 = vpop.permute.xlu0 %997
      %999 = vset.pattern.permute.xlu0 0
      %1000 = vperm.xlu0 %999, %v449
      %v1001 = vpop.permute.xlu0 %1000
      %vm1002 = vcmp.eq.s32.totalorder %v977, %v980
      %vm1003 = vcmp.eq.s32.totalorder %v977, %v983
      %vm1004 = vcmp.eq.s32.totalorder %v977, %v986
      %vm1005 = vcmp.eq.s32.totalorder %v977, %v989
      %vm1006 = vcmp.eq.s32.totalorder %v977, %v992
      %vm1007 = vcmp.eq.s32.totalorder %v977, %v995
      %vm1008 = vcmp.eq.s32.totalorder %v977, %v998
      %vm1009 = vcmp.eq.s32.totalorder %v977, %v1001
      %v1010 = vadd.s32 %v450, 32
      %v1011 = vadd.s32 %v451, 32
      %v1012 = vadd.s32 %v452, 32
      %v1013 = vadd.s32 %v453, 32
      %v1014 = vadd.s32 %v454, 32
      %v1015 = vadd.s32 %v455, 32
      %v1016 = vadd.s32 %v456, 32
      %v1017 = vadd.s32 %v457, 32
      %1018 = vset.pattern.permute.xlu0 0
      %1019 = vperm.xlu0 %1018, %v1010
      %v1020 = vpop.permute.xlu0 %1019
      %1021 = vset.pattern.permute.xlu0 0
      %1022 = vperm.xlu0 %1021, %v1011
      %v1023 = vpop.permute.xlu0 %1022
      %1024 = vset.pattern.permute.xlu0 0
      %1025 = vperm.xlu0 %1024, %v1012
      %v1026 = vpop.permute.xlu0 %1025
      %1027 = vset.pattern.permute.xlu0 0
      %1028 = vperm.xlu0 %1027, %v1013
      %v1029 = vpop.permute.xlu0 %1028
      %1030 = vset.pattern.permute.xlu0 0
      %1031 = vperm.xlu0 %1030, %v1014
      %v1032 = vpop.permute.xlu0 %1031
      %1033 = vset.pattern.permute.xlu0 0
      %1034 = vperm.xlu0 %1033, %v1015
      %v1035 = vpop.permute.xlu0 %1034
      %1036 = vset.pattern.permute.xlu0 0
      %1037 = vperm.xlu0 %1036, %v1016
      %v1038 = vpop.permute.xlu0 %1037
      %1039 = vset.pattern.permute.xlu0 0
      %1040 = vperm.xlu0 %1039, %v1017
      %v1041 = vpop.permute.xlu0 %1040
      %vm1042 = vcmp.eq.s32.totalorder %v977, %v1020
      %vm1043 = vcmp.eq.s32.totalorder %v977, %v1023
      %vm1044 = vcmp.eq.s32.totalorder %v977, %v1026
      %vm1045 = vcmp.eq.s32.totalorder %v977, %v1029
      %vm1046 = vcmp.eq.s32.totalorder %v977, %v1032
      %vm1047 = vcmp.eq.s32.totalorder %v977, %v1035
      %vm1048 = vcmp.eq.s32.totalorder %v977, %v1038
      %vm1049 = vcmp.eq.s32.totalorder %v977, %v1041
      %vm1050 = vmor %vm1002, %vm1042
      %vm1051 = vmor %vm1003, %vm1043
      %vm1052 = vmor %vm1004, %vm1044
      %vm1053 = vmor %vm1005, %vm1045
      %vm1054 = vmor %vm1006, %vm1046
      %vm1055 = vmor %vm1007, %vm1047
      %vm1056 = vmor %vm1008, %vm1048
      %vm1057 = vmor %vm1009, %vm1049
      %v1058 = vsel %vm1050, 1.0, 0.0
      %v1059 = vsel %vm1051, 1.0, 0.0
      %v1060 = vsel %vm1052, 1.0, 0.0
      %v1061 = vsel %vm1053, 1.0, 0.0
      %v1062 = vsel %vm1054, 1.0, 0.0
      %v1063 = vsel %vm1055, 1.0, 0.0
      %v1064 = vsel %vm1056, 1.0, 0.0
      %v1065 = vsel %vm1057, 1.0, 0.0
      %v1066 = vpack.c.bf16 %v1059, %v1058
      %v1067 = vpack.c.bf16 %v1061, %v1060
      %v1068 = vpack.c.bf16 %v1063, %v1062
      %v1069 = vpack.c.bf16 %v1065, %v1064
      %v1070 = vpack.c.bf16 %v899, %v896
      %v1071 = vpack.c.bf16 %v907, %v904
      %v1072 = vpack.c.bf16 %v965, %v962
      %v1073 = vpack.c.bf16 %v973, %v970
      %vm1074 = vcmask 523264
      %v1076 = vsel %vm1074, %v1066, 0
      %v1079 = vsel %vm1074, %v1067, 0
      %v1082 = vsel %vm1074, %v1068, 0
      %v1085 = vsel %vm1074, %v1069, 0
      %1087 = vmatprep.subr.bf16.mxu0 0
      %1088 = vmatpush1.bf16.msra.mxu0 %v1070
      %1089 = vmatprep.subr.bf16.mxu0 0
      %1090 = vmatpush1.bf16.msra.mxu0 %v1071
      %1091 = vmatprep.subr.bf16.mxu0 0
      %1092 = vmatpush1.bf16.msra.mxu0 %v1072
      %1093 = vmatprep.subr.bf16.mxu0 0
      %1094 = vmatpush1.bf16.msra.mxu0 %v1073
      %1095 = vmatprep.subr.bf16.mxu0 0
      %1096 = vmatpush1.bf16.msra.mxu0 0
      %1097 = vmatprep.subr.bf16.mxu0 0
      %1098 = vmatpush1.bf16.msra.mxu0 0
      %1099 = vmatprep.subr.bf16.mxu0 0
      %1100 = vmatpush1.bf16.msra.mxu0 0
      %1101 = vmatprep.subr.bf16.mxu0 0
      %1102 = vmatpush1.bf16.msra.mxu0 0
      %1103 = vmatprep.subr.bf16.mxu0 0
      %1104 = vmatpush1.bf16.msra.mxu0 0
      %1105 = vmatprep.subr.bf16.mxu0 0
      %1106 = vmatpush1.bf16.msra.mxu0 0
      %1107 = vmatprep.subr.bf16.mxu0 0
      %1108 = vmatpush1.bf16.msra.mxu0 0
      %1109 = vmatprep.subr.bf16.mxu0 0
      %1110 = vmatpush1.bf16.msra.mxu0 0
      %1111 = vmatprep.subr.bf16.mxu0 0
      %1112 = vmatpush1.bf16.msra.mxu0 0
      %1113 = vmatprep.subr.bf16.mxu0 0
      %1114 = vmatpush1.bf16.msra.mxu0 0
      %1115 = vmatprep.subr.bf16.mxu0 0
      %1116 = vmatpush1.bf16.msra.mxu0 0
      %1117 = vmatprep.subr.bf16.mxu0 0
      %1118 = vmatpush1.bf16.msra.mxu0 0
      %1119 = vmatprep.mubr.bf16.mxu0 0
      %1120 = vmatmul.mubr.bf16.gmra.mrb[0].mxu0 %v1076
      %v1121 = vpop.f32.mrb[0].mxu0
      %v1122 = vadd.f32 %v806, %v1121
      %v1123 = vpop.f32.mrb[0].mxu0
      %v1124 = vpop.f32.mrb[0].mxu0
      %v1125 = vadd.f32 %v809, %v1124
      %v1126 = vpop.f32.mrb[0].mxu0
      %1127 = vmatprep.mubr.bf16.mxu0 0
      %1128 = vmatmul.mubr.bf16.gmra.mrb[0].mxu0 %v1079
      %v1129 = vpop.f32.mrb[0].mxu0
      %v1130 = vadd.f32 %v814, %v1129
      %v1131 = vpop.f32.mrb[0].mxu0
      %v1132 = vpop.f32.mrb[0].mxu0
      %v1133 = vadd.f32 %v817, %v1132
      %v1134 = vpop.f32.mrb[0].mxu0
      %1135 = vmatprep.mubr.bf16.mxu0 0
      %1136 = vmatmul.mubr.bf16.gmra.mrb[0].mxu0 %v1082
      %v1137 = vpop.f32.mrb[0].mxu0
      %v1138 = vadd.f32 %v822, %v1137
      %v1139 = vpop.f32.mrb[0].mxu0
      %v1140 = vpop.f32.mrb[0].mxu0
      %v1141 = vadd.f32 %v825, %v1140
      %v1142 = vpop.f32.mrb[0].mxu0
      %1143 = vmatprep.mubr.bf16.mxu0 0
      %1144 = vmatmul.mubr.bf16.gmra.mrb[0].mxu0 %v1085
      %v1145 = vpop.f32.mrb[0].mxu0
      %v1146 = vadd.f32 %v830, %v1145
      %v1147 = vpop.f32.mrb[0].mxu0
      %v1148 = vpop.f32.mrb[0].mxu0
      %v1149 = vadd.f32 %v833, %v1148
      %v1150 = vpop.f32.mrb[0].mxu0
      %1151 = vdwg.mxu0
      %v1152 = vld [vmem:[%s5 + $0x4] sm:$0x1]
      %v1153 = vlaneseq
      %v1154 = vshrl.u32 %v1153, 7
      %v1155 = vsub.s32 0, %v1154
      %v1156 = vrot.slane %v1152, %v1155
      %v1157 = vadd.f32 %v1122, %v1156
      %v1158 = vadd.f32 %v1125, %v1156
      %v1159 = vadd.f32 %v1130, %v1156
      %v1160 = vadd.f32 %v1133, %v1156
      %v1161 = vadd.f32 %v1138, %v1156
      %v1162 = vadd.f32 %v1141, %v1156
      %v1163 = vadd.f32 %v1146, %v1156
      %v1164 = vadd.f32 %v1149, %v1156
      %v1165 = vmax.f32 %v1157, 0.0
      %v1166 = vmax.f32 %v1158, 0.0
      %v1167 = vmax.f32 %v1159, 0.0
      %v1168 = vmax.f32 %v1160, 0.0
      %v1169 = vmax.f32 %v1161, 0.0
      %v1170 = vmax.f32 %v1162, 0.0
      %v1171 = vmax.f32 %v1163, 0.0
      %v1172 = vmax.f32 %v1164, 0.0
      %s1173 = scalar_lea.vmem %s4, 64
      %v1174 = vld [vmem:[%s1173] sm:$0xf]
      %v1175 = vld [vmem:[%s1173 + $0x4] sm:$0xf]
      %v1176 = vld [vmem:[%s1173 + $0x8] sm:$0xf]
      %v1177 = vld [vmem:[%s1173 + $0xc] sm:$0xf]
      %v1178 = vpack.c.bf16 %v1166, %v1165
      %v1179 = vpack.c.bf16 %v1168, %v1167
      %v1180 = vpack.c.bf16 %v1170, %v1169
      %v1181 = vpack.c.bf16 %v1172, %v1171
      %v1182 = vld [vmem:[%s5 + $0x5] sm:$0x1]
      %v1183 = vlaneseq
      %v1184 = vshrl.u32 %v1183, 7
      %v1185 = vsub.s32 0, %v1184
      %v1186 = vrot.slane %v1182, %v1185
      %v1191 = vunpack.c.l.b16 %v1174
      %v1192 = vunpack.c.l.b16 %v1175
      %v1193 = vunpack.c.l.b16 %v1176
      %v1194 = vunpack.c.l.b16 %v1177
      %v1195 = vpack.c.b16 %v1192, %v1191
      %v1196 = vpack.c.b16 %v1194, %v1193
      %v1200 = vsel %vm561, %v1178, 0
      %v1203 = vsel %vm561, %v1179, 0
      %v1206 = vsel %vm561, %v1180, 0
      %v1209 = vsel %vm561, %v1181, 0
      %1211 = vmatprep.subr.bf16.mxu0 0
      %1212 = vmatpush1.bf16.msra.mxu0 %v1195
      %1213 = vmatprep.subr.bf16.mxu0 0
      %1214 = vmatpush1.bf16.msra.mxu0 %v1196
      %1215 = vmatprep.subr.bf16.mxu0 0
      %1216 = vmatpush1.bf16.msra.mxu0 0
      %1217 = vmatprep.subr.bf16.mxu0 0
      %1218 = vmatpush1.bf16.msra.mxu0 0
      %1219 = vmatprep.subr.bf16.mxu0 0
      %1220 = vmatpush1.bf16.msra.mxu0 0
      %1221 = vmatprep.subr.bf16.mxu0 0
      %1222 = vmatpush1.bf16.msra.mxu0 0
      %1223 = vmatprep.subr.bf16.mxu0 0
      %1224 = vmatpush1.bf16.msra.mxu0 0
      %1225 = vmatprep.subr.bf16.mxu0 0
      %1226 = vmatpush1.bf16.msra.mxu0 0
      %1227 = vmatprep.subr.bf16.mxu0 0
      %1228 = vmatpush1.bf16.msra.mxu0 0
      %1229 = vmatprep.subr.bf16.mxu0 0
      %1230 = vmatpush1.bf16.msra.mxu0 0
      %1231 = vmatprep.subr.bf16.mxu0 0
      %1232 = vmatpush1.bf16.msra.mxu0 0
      %1233 = vmatprep.subr.bf16.mxu0 0
      %1234 = vmatpush1.bf16.msra.mxu0 0
      %1235 = vmatprep.subr.bf16.mxu0 0
      %1236 = vmatpush1.bf16.msra.mxu0 0
      %1237 = vmatprep.subr.bf16.mxu0 0
      %1238 = vmatpush1.bf16.msra.mxu0 0
      %1239 = vmatprep.subr.bf16.mxu0 0
      %1240 = vmatpush1.bf16.msra.mxu0 0
      %1241 = vmatprep.subr.bf16.mxu0 0
      %1242 = vmatpush1.bf16.msra.mxu0 0
      %1243 = vmatprep.mubr.bf16.mxu0 0
      %1244 = vmatmul.mubr.bf16.gmra.mrb[0].mxu0 %v1200
      %v1245 = vpop.f32.mrb[0].mxu0
      %v1246 = vadd.f32 %v1186, %v1245
      %v1247 = vpop.f32.mrb[0].mxu0
      %v1248 = vpop.f32.mrb[0].mxu0
      %v1249 = vadd.f32 %v1186, %v1248
      %v1250 = vpop.f32.mrb[0].mxu0
      %1251 = vmatprep.mubr.bf16.mxu0 0
      %1252 = vmatmul.mubr.bf16.gmra.mrb[0].mxu0 %v1203
      %v1253 = vpop.f32.mrb[0].mxu0
      %v1254 = vadd.f32 %v1186, %v1253
      %v1255 = vpop.f32.mrb[0].mxu0
      %v1256 = vpop.f32.mrb[0].mxu0
      %v1257 = vadd.f32 %v1186, %v1256
      %v1258 = vpop.f32.mrb[0].mxu0
      %1259 = vmatprep.mubr.bf16.mxu0 0
      %1260 = vmatmul.mubr.bf16.gmra.mrb[0].mxu0 %v1206
      %v1261 = vpop.f32.mrb[0].mxu0
      %v1262 = vadd.f32 %v1186, %v1261
      %v1263 = vpop.f32.mrb[0].mxu0
      %v1264 = vpop.f32.mrb[0].mxu0
      %v1265 = vadd.f32 %v1186, %v1264
      %v1266 = vpop.f32.mrb[0].mxu0
      %1267 = vmatprep.mubr.bf16.mxu0 0
      %1268 = vmatmul.mubr.bf16.gmra.mrb[0].mxu0 %v1209
      %v1269 = vpop.f32.mrb[0].mxu0
      %v1270 = vadd.f32 %v1186, %v1269
      %v1271 = vpop.f32.mrb[0].mxu0
      %v1272 = vpop.f32.mrb[0].mxu0
      %v1273 = vadd.f32 %v1186, %v1272
      %v1274 = vpop.f32.mrb[0].mxu0
      %1275 = vdwg.mxu0
      %1276 = vset.pattern.permute.xlu0 0
      %1277 = vperm.xlu0 %1276, %v450
      %v1278 = vpop.permute.xlu0 %1277
      %1279 = vset.pattern.permute.xlu0 0
      %1280 = vperm.xlu0 %1279, %v451
      %v1281 = vpop.permute.xlu0 %1280
      %1282 = vset.pattern.permute.xlu0 0
      %1283 = vperm.xlu0 %1282, %v452
      %v1284 = vpop.permute.xlu0 %1283
      %1285 = vset.pattern.permute.xlu0 0
      %1286 = vperm.xlu0 %1285, %v453
      %v1287 = vpop.permute.xlu0 %1286
      %1288 = vset.pattern.permute.xlu0 0
      %1289 = vperm.xlu0 %1288, %v454
      %v1290 = vpop.permute.xlu0 %1289
      %1291 = vset.pattern.permute.xlu0 0
      %1292 = vperm.xlu0 %1291, %v455
      %v1293 = vpop.permute.xlu0 %1292
      %1294 = vset.pattern.permute.xlu0 0
      %1295 = vperm.xlu0 %1294, %v456
      %v1296 = vpop.permute.xlu0 %1295
      %1297 = vset.pattern.permute.xlu0 0
      %1298 = vperm.xlu0 %1297, %v457
      %v1299 = vpop.permute.xlu0 %1298
      %vm1300 = vcmp.eq.s32.totalorder %v977, %v1278
      %vm1301 = vcmp.eq.s32.totalorder %v977, %v1281
      %vm1302 = vcmp.eq.s32.totalorder %v977, %v1284
      %vm1303 = vcmp.eq.s32.totalorder %v977, %v1287
      %vm1304 = vcmp.eq.s32.totalorder %v977, %v1290
      %vm1305 = vcmp.eq.s32.totalorder %v977, %v1293
      %vm1306 = vcmp.eq.s32.totalorder %v977, %v1296
      %vm1307 = vcmp.eq.s32.totalorder %v977, %v1299
      %v1308 = vsel %vm1300, 1.0, 0.0
      %v1309 = vsel %vm1301, 1.0, 0.0
      %v1310 = vsel %vm1302, 1.0, 0.0
      %v1311 = vsel %vm1303, 1.0, 0.0
      %v1312 = vsel %vm1304, 1.0, 0.0
      %v1313 = vsel %vm1305, 1.0, 0.0
      %v1314 = vsel %vm1306, 1.0, 0.0
      %v1315 = vsel %vm1307, 1.0, 0.0
      %v1316 = vpack.c.bf16 %v1309, %v1308
      %v1317 = vpack.c.bf16 %v1311, %v1310
      %v1318 = vpack.c.bf16 %v1313, %v1312
      %v1319 = vpack.c.bf16 %v1315, %v1314
      %v1320 = vpack.c.bf16 %v1249, %v1246
      %v1321 = vpack.c.bf16 %v1257, %v1254
      %v1322 = vpack.c.bf16 %v1265, %v1262
      %v1323 = vpack.c.bf16 %v1273, %v1270
      %1324 = vxpose.xlu0.c.b16.start [1/8] %v1316, 128
      %1325 = vxpose.xlu0.c.b16.cont [2/8] %v1317, 128
      %1326 = vxpose.xlu0.c.b16.cont [3/8] %v1318, 128
      %1327 = vxpose.xlu0.c.b16.cont [4/8] %v1319, 128
      %1328 = vxpose.xlu0.c.b16.cont [5/8] 0, 128
      %1329 = vxpose.xlu0.c.b16.cont [6/8] 0, 128
      %1330 = vxpose.xlu0.c.b16.cont [7/8] 0, 128
      %1331 = vxpose.xlu0.c.b16.end [8/8] 0, 128
      %v1332 = vpop.trf.xlu0
      %v1333 = vpop.trf.xlu0
      %v1334 = vpop.trf.xlu0
      %v1335 = vpop.trf.xlu0
      %v1336 = vpop.trf.xlu0
      %v1337 = vpop.trf.xlu0
      %v1338 = vpop.trf.xlu0
      %v1339 = vpop.trf.xlu0
      %v1341 = vsel %vm1074, %v1332, 0
      %v1344 = vsel %vm1074, %v1333, 0
      %1346 = vmatprep.subr.bf16.mxu0 0
      %1347 = vmatpush1.bf16.msra.mxu0 %v1320
      %1348 = vmatprep.subr.bf16.mxu0 0
      %1349 = vmatpush1.bf16.msra.mxu0 %v1321
      %1350 = vmatprep.subr.bf16.mxu0 0
      %1351 = vmatpush1.bf16.msra.mxu0 %v1322
      %1352 = vmatprep.subr.bf16.mxu0 0
      %1353 = vmatpush1.bf16.msra.mxu0 %v1323
      %1354 = vmatprep.subr.bf16.mxu0 0
      %1355 = vmatpush1.bf16.msra.mxu0 0
      %1356 = vmatprep.subr.bf16.mxu0 0
      %1357 = vmatpush1.bf16.msra.mxu0 0
      %1358 = vmatprep.subr.bf16.mxu0 0
      %1359 = vmatpush1.bf16.msra.mxu0 0
      %1360 = vmatprep.subr.bf16.mxu0 0
      %1361 = vmatpush1.bf16.msra.mxu0 0
      %1362 = vmatprep.subr.bf16.mxu0 0
      %1363 = vmatpush1.bf16.msra.mxu0 0
      %1364 = vmatprep.subr.bf16.mxu0 0
      %1365 = vmatpush1.bf16.msra.mxu0 0
      %1366 = vmatprep.subr.bf16.mxu0 0
      %1367 = vmatpush1.bf16.msra.mxu0 0
      %1368 = vmatprep.subr.bf16.mxu0 0
      %1369 = vmatpush1.bf16.msra.mxu0 0
      %1370 = vmatprep.subr.bf16.mxu0 0
      %1371 = vmatpush1.bf16.msra.mxu0 0
      %1372 = vmatprep.subr.bf16.mxu0 0
      %1373 = vmatpush1.bf16.msra.mxu0 0
      %1374 = vmatprep.subr.bf16.mxu0 0
      %1375 = vmatpush1.bf16.msra.mxu0 0
      %1376 = vmatprep.subr.bf16.mxu0 0
      %1377 = vmatpush1.bf16.msra.mxu0 0
      %1378 = vmatprep.mubr.bf16.mxu0 0
      %1379 = vmatmul.mubr.bf16.gmra.mrb[0].mxu0 %v1341
      %v1380 = vpop.f32.mrb[0].mxu0
      %v1381 = vadd.f32 0.0, %v1380
      %v1382 = vpop.f32.mrb[0].mxu0
      %v1383 = vpop.f32.mrb[0].mxu0
      %v1384 = vadd.f32 0.0, %v1383
      %v1385 = vpop.f32.mrb[0].mxu0
      %1386 = vmatprep.mubr.bf16.mxu0 0
      %1387 = vmatmul.mubr.bf16.gmra.mrb[0].mxu0 %v1344
      %v1388 = vpop.f32.mrb[0].mxu0
      %v1389 = vadd.f32 0.0, %v1388
      %v1390 = vpop.f32.mrb[0].mxu0
      %v1391 = vpop.f32.mrb[0].mxu0
      %v1392 = vadd.f32 0.0, %v1391
      %v1393 = vpop.f32.mrb[0].mxu0
      %1394 = vdwg.mxu0
      %s1395 = scalar_lea.vmem %s4, 80
      %v1396 = vld [vmem:[%s1395] sm:$0xf]
      %v1397 = vld [vmem:[%s1395 + $0x4] sm:$0xf]
      %v1398 = vld [vmem:[%s1395 + $0x8] sm:$0xf]
      %v1399 = vld [vmem:[%s1395 + $0xc] sm:$0xf]
      %v1404 = vunpack.c.l.b16 %v1396
      %v1405 = vunpack.c.l.b16 %v1397
      %v1406 = vunpack.c.l.b16 %v1398
      %v1407 = vunpack.c.l.b16 %v1399
      %v1408 = vpack.c.b16 %v1405, %v1404
      %v1409 = vpack.c.b16 %v1407, %v1406
      %1412 = vmatprep.subr.bf16.mxu0 0
      %1413 = vmatpush1.bf16.msra.mxu0 %v1408
      %1414 = vmatprep.subr.bf16.mxu0 0
      %1415 = vmatpush1.bf16.msra.mxu0 %v1409
      %1416 = vmatprep.subr.bf16.mxu0 0
      %1417 = vmatpush1.bf16.msra.mxu0 0
      %1418 = vmatprep.subr.bf16.mxu0 0
      %1419 = vmatpush1.bf16.msra.mxu0 0
      %1420 = vmatprep.subr.bf16.mxu0 0
      %1421 = vmatpush1.bf16.msra.mxu0 0
      %1422 = vmatprep.subr.bf16.mxu0 0
      %1423 = vmatpush1.bf16.msra.mxu0 0
      %1424 = vmatprep.subr.bf16.mxu0 0
      %1425 = vmatpush1.bf16.msra.mxu0 0
      %1426 = vmatprep.subr.bf16.mxu0 0
      %1427 = vmatpush1.bf16.msra.mxu0 0
      %1428 = vmatprep.subr.bf16.mxu0 0
      %1429 = vmatpush1.bf16.msra.mxu0 0
      %1430 = vmatprep.subr.bf16.mxu0 0
      %1431 = vmatpush1.bf16.msra.mxu0 0
      %1432 = vmatprep.subr.bf16.mxu0 0
      %1433 = vmatpush1.bf16.msra.mxu0 0
      %1434 = vmatprep.subr.bf16.mxu0 0
      %1435 = vmatpush1.bf16.msra.mxu0 0
      %1436 = vmatprep.subr.bf16.mxu0 0
      %1437 = vmatpush1.bf16.msra.mxu0 0
      %1438 = vmatprep.subr.bf16.mxu0 0
      %1439 = vmatpush1.bf16.msra.mxu0 0
      %1440 = vmatprep.subr.bf16.mxu0 0
      %1441 = vmatpush1.bf16.msra.mxu0 0
      %1442 = vmatprep.subr.bf16.mxu0 0
      %1443 = vmatpush1.bf16.msra.mxu0 0
      %1444 = vmatprep.mubr.bf16.mxu0 0
      %1445 = vmatmul.mubr.bf16.gmra.mrb[0].mxu0 %v856
      %v1446 = vpop.f32.mrb[0].mxu0
      %v1447 = vadd.f32 %v1381, %v1446
      %v1448 = vpop.f32.mrb[0].mxu0
      %v1449 = vpop.f32.mrb[0].mxu0
      %v1450 = vadd.f32 %v1384, %v1449
      %v1451 = vpop.f32.mrb[0].mxu0
      %1452 = vmatprep.mubr.bf16.mxu0 0
      %1453 = vmatmul.mubr.bf16.gmra.mrb[0].mxu0 %v859
      %v1454 = vpop.f32.mrb[0].mxu0
      %v1455 = vadd.f32 %v1389, %v1454
      %v1456 = vpop.f32.mrb[0].mxu0
      %v1457 = vpop.f32.mrb[0].mxu0
      %v1458 = vadd.f32 %v1392, %v1457
      %v1459 = vpop.f32.mrb[0].mxu0
      %1460 = vdwg.mxu0
      %v1461 = vld [vmem:[%s5 + $0x6] sm:$0x1]
      %v1462 = vlaneseq
      %v1463 = vshrl.u32 %v1462, 7
      %v1464 = vsub.s32 0, %v1463
      %v1465 = vrot.slane %v1461, %v1464
      %v1466 = vadd.f32 %v1447, %v1465
      %v1467 = vadd.f32 %v1450, %v1465
      %v1468 = vadd.f32 %v1455, %v1465
      %v1469 = vadd.f32 %v1458, %v1465
      %v1470 = vmax.f32 %v1466, 0.0
      %v1471 = vmax.f32 %v1467, 0.0
      %v1472 = vmax.f32 %v1468, 0.0
      %v1473 = vmax.f32 %v1469, 0.0
      %s1474 = scalar_lea.vmem %s4, 96
      %v1475 = vld [vmem:[%s1474] sm:$0xf]
      %v1476 = vld [vmem:[%s1474 + $0x4] sm:$0xf]
      %v1477 = vld [vmem:[%s1474 + $0x8] sm:$0xf]
      %v1478 = vld [vmem:[%s1474 + $0xc] sm:$0xf]
      %v1479 = vpack.c.bf16 %v1471, %v1470
      %v1480 = vpack.c.bf16 %v1473, %v1472
      %v1485 = vunpack.c.l.b16 %v1475
      %v1486 = vunpack.c.l.b16 %v1476
      %v1487 = vunpack.c.l.b16 %v1477
      %v1488 = vunpack.c.l.b16 %v1478
      %v1489 = vpack.c.b16 %v1486, %v1485
      %v1490 = vpack.c.b16 %v1488, %v1487
      %v1494 = vsel %vm561, %v1479, 0
      %v1497 = vsel %vm561, %v1480, 0
      %1499 = vmatprep.subr.bf16.mxu0 0
      %1500 = vmatpush1.bf16.msra.mxu0 %v1489
      %1501 = vmatprep.subr.bf16.mxu0 0
      %1502 = vmatpush1.bf16.msra.mxu0 %v1490
      %1503 = vmatprep.subr.bf16.mxu0 0
      %1504 = vmatpush1.bf16.msra.mxu0 0
      %1505 = vmatprep.subr.bf16.mxu0 0
      %1506 = vmatpush1.bf16.msra.mxu0 0
      %1507 = vmatprep.subr.bf16.mxu0 0
      %1508 = vmatpush1.bf16.msra.mxu0 0
      %1509 = vmatprep.subr.bf16.mxu0 0
      %1510 = vmatpush1.bf16.msra.mxu0 0
      %1511 = vmatprep.subr.bf16.mxu0 0
      %1512 = vmatpush1.bf16.msra.mxu0 0
      %1513 = vmatprep.subr.bf16.mxu0 0
      %1514 = vmatpush1.bf16.msra.mxu0 0
      %1515 = vmatprep.subr.bf16.mxu0 0
      %1516 = vmatpush1.bf16.msra.mxu0 0
      %1517 = vmatprep.subr.bf16.mxu0 0
      %1518 = vmatpush1.bf16.msra.mxu0 0
      %1519 = vmatprep.subr.bf16.mxu0 0
      %1520 = vmatpush1.bf16.msra.mxu0 0
      %1521 = vmatprep.subr.bf16.mxu0 0
      %1522 = vmatpush1.bf16.msra.mxu0 0
      %1523 = vmatprep.subr.bf16.mxu0 0
      %1524 = vmatpush1.bf16.msra.mxu0 0
      %1525 = vmatprep.subr.bf16.mxu0 0
      %1526 = vmatpush1.bf16.msra.mxu0 0
      %1527 = vmatprep.subr.bf16.mxu0 0
      %1528 = vmatpush1.bf16.msra.mxu0 0
      %1529 = vmatprep.subr.bf16.mxu0 0
      %1530 = vmatpush1.bf16.msra.mxu0 0
      %1531 = vmatprep.mubr.bf16.mxu0 0
      %1532 = vmatmul.mubr.bf16.gmra.mrb[0].mxu0 %v1494
      %v1533 = vpop.f32.mrb[0].mxu0
      %v1534 = vadd.f32 0.0, %v1533
      %v1535 = vpop.f32.mrb[0].mxu0
      %v1536 = vpop.f32.mrb[0].mxu0
      %v1537 = vadd.f32 0.0, %v1536
      %v1538 = vpop.f32.mrb[0].mxu0
      %1539 = vmatprep.mubr.bf16.mxu0 0
      %1540 = vmatmul.mubr.bf16.gmra.mrb[0].mxu0 %v1497
      %v1541 = vpop.f32.mrb[0].mxu0
      %v1542 = vadd.f32 0.0, %v1541
      %v1543 = vpop.f32.mrb[0].mxu0
      %v1544 = vpop.f32.mrb[0].mxu0
      %v1545 = vadd.f32 0.0, %v1544
      %v1546 = vpop.f32.mrb[0].mxu0
      %1547 = vdwg.mxu0
      %v1548 = vadd.f32 %v603, %v1534
      %v1549 = vadd.f32 %v606, %v1537
      %v1550 = vadd.f32 %v611, %v1542
      %v1551 = vadd.f32 %v614, %v1545
      %v1552 = vld [vmem:[%s5 + $0x7] sm:$0x1]
      %v1553 = vlaneseq
      %v1554 = vshrl.u32 %v1553, 7
      %v1555 = vsub.s32 0, %v1554
      %v1556 = vrot.slane %v1552, %v1555
      %v1557 = vadd.f32 %v1548, %v1556
      %v1558 = vadd.f32 %v1549, %v1556
      %v1559 = vadd.f32 %v1550, %v1556
      %v1560 = vadd.f32 %v1551, %v1556
      %s1561 = scalar_lea.vmem %s4, 112
      %v1562 = vld [vmem:[%s1561] sm:$0xf]
      %v1563 = vld [vmem:[%s1561 + $0x4] sm:$0xf]
      %v1564 = vld [vmem:[%s1561 + $0x8] sm:$0xf]
      %v1565 = vld [vmem:[%s1561 + $0xc] sm:$0xf]
      %v1566 = vpack.c.bf16 %v1558, %v1557
      %v1567 = vpack.c.bf16 %v1560, %v1559
      %v1568 = vld [vmem:[%s5 + $0x8] sm:$0x1]
      %v1569 = vlaneseq
      %v1570 = vshrl.u32 %v1569, 7
      %v1571 = vsub.s32 0, %v1570
      %v1572 = vrot.slane %v1568, %v1571
      %v1577 = vunpack.c.l.b16 %v1562
      %v1578 = vunpack.c.l.b16 %v1563
      %v1579 = vunpack.c.l.b16 %v1564
      %v1580 = vunpack.c.l.b16 %v1565
      %v1581 = vpack.c.b16 %v1578, %v1577
      %v1582 = vpack.c.b16 %v1580, %v1579
      %v1586 = vsel %vm561, %v1566, 0
      %v1589 = vsel %vm561, %v1567, 0
      %1591 = vmatprep.subr.bf16.mxu0 0
      %1592 = vmatpush1.bf16.msra.mxu0 %v1581
      %1593 = vmatprep.subr.bf16.mxu0 0
      %1594 = vmatpush1.bf16.msra.mxu0 %v1582
      %1595 = vmatprep.subr.bf16.mxu0 0
      %1596 = vmatpush1.bf16.msra.mxu0 0
      %1597 = vmatprep.subr.bf16.mxu0 0
      %1598 = vmatpush1.bf16.msra.mxu0 0
      %1599 = vmatprep.subr.bf16.mxu0 0
      %1600 = vmatpush1.bf16.msra.mxu0 0
      %1601 = vmatprep.subr.bf16.mxu0 0
      %1602 = vmatpush1.bf16.msra.mxu0 0
      %1603 = vmatprep.subr.bf16.mxu0 0
      %1604 = vmatpush1.bf16.msra.mxu0 0
      %1605 = vmatprep.subr.bf16.mxu0 0
      %1606 = vmatpush1.bf16.msra.mxu0 0
      %1607 = vmatprep.subr.bf16.mxu0 0
      %1608 = vmatpush1.bf16.msra.mxu0 0
      %1609 = vmatprep.subr.bf16.mxu0 0
      %1610 = vmatpush1.bf16.msra.mxu0 0
      %1611 = vmatprep.subr.bf16.mxu0 0
      %1612 = vmatpush1.bf16.msra.mxu0 0
      %1613 = vmatprep.subr.bf16.mxu0 0
      %1614 = vmatpush1.bf16.msra.mxu0 0
      %1615 = vmatprep.subr.bf16.mxu0 0
      %1616 = vmatpush1.bf16.msra.mxu0 0
      %1617 = vmatprep.subr.bf16.mxu0 0
      %1618 = vmatpush1.bf16.msra.mxu0 0
      %1619 = vmatprep.subr.bf16.mxu0 0
      %1620 = vmatpush1.bf16.msra.mxu0 0
      %1621 = vmatprep.subr.bf16.mxu0 0
      %1622 = vmatpush1.bf16.msra.mxu0 0
      %1623 = vmatprep.mubr.bf16.mxu0 0
      %1624 = vmatmul.mubr.bf16.gmra.mrb[0].mxu0 %v1586
      %v1625 = vpop.f32.mrb[0].mxu0
      %v1626 = vadd.f32 %v1572, %v1625
      %v1627 = vpop.f32.mrb[0].mxu0
      %v1628 = vpop.f32.mrb[0].mxu0
      %v1629 = vadd.f32 %v1572, %v1628
      %v1630 = vpop.f32.mrb[0].mxu0
      %1631 = vmatprep.mubr.bf16.mxu0 0
      %1632 = vmatmul.mubr.bf16.gmra.mrb[0].mxu0 %v1589
      %v1633 = vpop.f32.mrb[0].mxu0
      %v1634 = vadd.f32 %v1572, %v1633
      %v1635 = vpop.f32.mrb[0].mxu0
      %v1636 = vpop.f32.mrb[0].mxu0
      %v1637 = vadd.f32 %v1572, %v1636
      %v1638 = vpop.f32.mrb[0].mxu0
      %1639 = vdwg.mxu0
      %v1640 = vmax.f32 %v1626, 0.0
      %v1641 = vmax.f32 %v1629, 0.0
      %v1642 = vmax.f32 %v1634, 0.0
      %v1643 = vmax.f32 %v1637, 0.0
      %v1644 = vld [vmem:[%s8] sm:$0xf]
      %v1645 = vld [vmem:[%s8 + $0x4] sm:$0xf]
      %v1646 = vld [vmem:[%s8 + $0x8] sm:$0xf]
      %v1647 = vld [vmem:[%s8 + $0xc] sm:$0xf]
      %v1648 = vpack.c.bf16 %v1641, %v1640
      %v1649 = vpack.c.bf16 %v1643, %v1642
      %v1650 = vld [vmem:[%s9] sm:$0x1]
      %v1652 = vlaneseq
      %v1653 = vshrl.u32 %v1652, 7
      %v1654 = vsub.s32 0, %v1653
      %v1655 = vrot.slane %v1650, %v1654
      %v1661 = vunpack.c.l.b16 %v1644
      %v1662 = vunpack.c.l.b16 %v1645
      %v1663 = vunpack.c.l.b16 %v1646
      %v1664 = vunpack.c.l.b16 %v1647
      %v1665 = vpack.c.b16 %v1662, %v1661
      %v1666 = vpack.c.b16 %v1664, %v1663
      %v1670 = vsel %vm561, %v1648, 0
      %v1673 = vsel %vm561, %v1649, 0
      %1675 = vmatprep.subr.bf16.mxu0 0
      %1676 = vmatpush1.bf16.msra.mxu0 %v1665
      %1677 = vmatprep.subr.bf16.mxu0 0
      %1678 = vmatpush1.bf16.msra.mxu0 %v1666
      %1679 = vmatprep.subr.bf16.mxu0 0
      %1680 = vmatpush1.bf16.msra.mxu0 0
      %1681 = vmatprep.subr.bf16.mxu0 0
      %1682 = vmatpush1.bf16.msra.mxu0 0
      %1683 = vmatprep.subr.bf16.mxu0 0
      %1684 = vmatpush1.bf16.msra.mxu0 0
      %1685 = vmatprep.subr.bf16.mxu0 0
      %1686 = vmatpush1.bf16.msra.mxu0 0
      %1687 = vmatprep.subr.bf16.mxu0 0
      %1688 = vmatpush1.bf16.msra.mxu0 0
      %1689 = vmatprep.subr.bf16.mxu0 0
      %1690 = vmatpush1.bf16.msra.mxu0 0
      %1691 = vmatprep.subr.bf16.mxu0 0
      %1692 = vmatpush1.bf16.msra.mxu0 0
      %1693 = vmatprep.subr.bf16.mxu0 0
      %1694 = vmatpush1.bf16.msra.mxu0 0
      %1695 = vmatprep.subr.bf16.mxu0 0
      %1696 = vmatpush1.bf16.msra.mxu0 0
      %1697 = vmatprep.subr.bf16.mxu0 0
      %1698 = vmatpush1.bf16.msra.mxu0 0
      %1699 = vmatprep.subr.bf16.mxu0 0
      %1700 = vmatpush1.bf16.msra.mxu0 0
      %1701 = vmatprep.subr.bf16.mxu0 0
      %1702 = vmatpush1.bf16.msra.mxu0 0
      %1703 = vmatprep.subr.bf16.mxu0 0
      %1704 = vmatpush1.bf16.msra.mxu0 0
      %1705 = vmatprep.subr.bf16.mxu0 0
      %1706 = vmatpush1.bf16.msra.mxu0 0
      %1707 = vmatprep.mubr.bf16.mxu0 0
      %1708 = vmatmul.mubr.bf16.gmra.mrb[0].mxu0 %v1670
      %v1709 = vpop.f32.mrb[0].mxu0
      %v1710 = vadd.f32 %v1655, %v1709
      %v1711 = vpop.f32.mrb[0].mxu0
      %v1712 = vpop.f32.mrb[0].mxu0
      %v1713 = vadd.f32 %v1655, %v1712
      %v1714 = vpop.f32.mrb[0].mxu0
      %1715 = vmatprep.mubr.bf16.mxu0 0
      %1716 = vmatmul.mubr.bf16.gmra.mrb[0].mxu0 %v1673
      %v1717 = vpop.f32.mrb[0].mxu0
      %v1718 = vadd.f32 %v1655, %v1717
      %v1719 = vpop.f32.mrb[0].mxu0
      %v1720 = vpop.f32.mrb[0].mxu0
      %v1721 = vadd.f32 %v1655, %v1720
      %v1722 = vpop.f32.mrb[0].mxu0
      %1723 = vdwg.mxu0
      %1724 = vst [vmem:[%s427] sm:$0xff] %v1710
      %1725 = vst [vmem:[%s427 + $0x8] sm:$0xff] %v1713
      %1726 = vst [vmem:[%s427 + $0x10] sm:$0xff] %v1718
      %1727 = vst [vmem:[%s427 + $0x18] sm:$0xff] %v1721
      %s1728 = smul.u32 4, %s21
      %p1729 = scmp.lt.s32.totalorder %s1728, 7
      %s1730 = scalar_select %p1729, %s1728, 7
      %s1731 = smul.addr %s1730, 8
      %s1732 = scalar_lea.vmem %s10, %s1731
      // Predicated region
      $region61: #{score_model.1} parent=59 // pred_check
        %p1733 = pneg %p269
      $region62: #{score_model.1} parent=59 // pred_check_branch
        %1735 = sbr.rel (%p1733) target = $region64
      $region63: #{score_model.1} parent=59 // pred_region
        %s1736 = smul.u32 4, %s21
      $region64: #{score_model.1} parent=59 // pred_fallthru
        _
    $region60: #{score_model.1} parent=5 // pred_fallthru
      _
    %p1737 = scmp.le.s32.totalorder 2, %s16
    // Predicated region
    $region65: #{score_model.1} parent=5 // pred_check
      %p1738 = pneg %p1737
    $region66: #{score_model.1} parent=5 // pred_check_branch
      %1740 = sbr.rel (%p1738) target = $region68
    $region67: #{score_model.1} parent=5 // pred_region
      %s1741 = ssub.s32 %s16, 2
      // Predicated region
      $region69: #{score_model.1} parent=67 // pred_check
        %p1742 = pneg %p275
      $region70: #{score_model.1} parent=67 // pred_check_branch
        %1744 = sbr.rel (%p1742) target = $region72
      $region71: #{score_model.1} parent=67 // pred_region
        %s1745 = smul.u32 4, %s22
        %p1746 = scmp.lt.s32.totalorder %s1745, 7
        %s1747 = scalar_select %p1746, %s1745, 7
        %s1748 = smul.addr %s1747, 8
        %s1749 = scalar_lea.vmem %s10, %s1748
      $region72: #{score_model.1} parent=67 // pred_fallthru
        _
    $region68: #{score_model.1} parent=5 // pred_fallthru
      _
  $region6: #{score_model.1} parent=0 // loop_footer
    %s20 = sadd.s32 1, %s16
  $region7: #{score_model.1} parent=0 // loop_footer_branch
    %15 = sbr.rel target = $region3
  $region8: #{score_model.1} parent=0 // loop_exit
    _

</llo_original>
